<compile_context>
chip_gen: v5e
topology: v5e:2x2
jax: 0.10.0
libtpu: 0.0.40
codegen_flags: <defaults>
</compile_context>

<pallas_src>
import functools

import jax
import jax.numpy as jnp
import numpy as np
from jax import lax
from jax.experimental import pallas as pl
from jax.experimental.pallas import tpu as pltpu

IGNORE_INDEX = 255
LANES = 128
SUBLANES = 8
_UNROLL_CHANNEL_LIMIT = 24   # fully unroll the channel loops up to this many classes


def _joint_edge_stats_kernel(x_ref, tg_ref, out_ref,
                             cnt_s_ref, sum_s_ref, cnt_a_ref, sum_a_ref,
                             *, num_classes, r_tile, sub, tiles_per_half,
                             hw, needs_mask):
    """One (image, spatial half, spatial tile) grid step.

    x_ref:   (C, r_tile, 128) logits slab (lane-dense spatial layout, f32/bf16).
    tg_ref:  (r_tile, 128) int32 -- bits [0,16): seg target, bit 16: edge gate.
    out_ref: (4, C) f32 -- rows [cnt_seg, sum_seg, cnt_att, sum_att], written
             once at the last tile of this (image, half).
    scratch: four (C, sub, 128) f32 per-class accumulators (vreg-aligned).
    """
    t = pl.program_id(2)
    C = num_classes

    @pl.when(t == 0)
    def _():
        cnt_s_ref[...] = jnp.zeros_like(cnt_s_ref)
        sum_s_ref[...] = jnp.zeros_like(sum_s_ref)
        cnt_a_ref[...] = jnp.zeros_like(cnt_a_ref)
        sum_a_ref[...] = jnp.zeros_like(sum_a_ref)

    packed = tg_ref[...]                                      # (r, 128) int32
    seg_t = jnp.bitwise_and(packed, 0xFFFF)                   # seg target
    gate_f = jnp.right_shift(packed, 16).astype(jnp.float32)  # edge gate 0/1

    if needs_mask:
        # Logical (unclamped) tile index -> global pixel index; everything past
        # H*W (lane pad, partial blocks, phantom tiles of the second half) is
        # excluded.  Padded/stale input values never reach the accumulators
        # because all per-class terms go through where-selects on `eq`.
        h = pl.program_id(1)
        tile_idx = h * tiles_per_half + t
        row = lax.broadcasted_iota(jnp.int32, (r_tile, LANES), 0)
        lane = lax.broadcasted_iota(jnp.int32, (r_tile, LANES), 1)
        pix = (tile_idx * r_tile + row) * LANES + lane
        valid = pix < hw
    else:
        valid = None

    def load(c):
        return x_ref[c].astype(jnp.float32)

    def rowsum(a):
        # (r_tile, 128) -> (sub, 128): pure vreg adds (no cross-sublane XLU work
        # and no masked single-sublane stores in the hot loop).
        if sub == SUBLANES:
            return jnp.sum(a.reshape(r_tile // SUBLANES, SUBLANES, LANES), axis=0)
        return jnp.sum(a, axis=0, keepdims=True)

    def accumulate(c, logp_c):
        eq = seg_t == c
        if needs_mask:
            eq = jnp.logical_and(eq, valid)
        oh = jnp.where(eq, 1.0, 0.0)
        lp = jnp.where(eq, logp_c, 0.0)
        cnt_s_ref[c] += rowsum(oh)
        sum_s_ref[c] += rowsum(lp)
        cnt_a_ref[c] += rowsum(gate_f * oh)      # attention terms = gate * seg terms
        sum_a_ref[c] += rowsum(gate_f * lp)

    # Streaming log-softmax over channels + per-class accumulation.  Everything
    # is elementwise on (r_tile, 128) slabs; exp/log hit the EUP slot.
    if C <= _UNROLL_CHANNEL_LIMIT:
        m = load(0)
        for c in range(1, C):
            m = jnp.maximum(m, load(c))
        s = jnp.exp(load(0) - m)
        for c in range(1, C):
            s = s + jnp.exp(load(c) - m)
        lse = m + jnp.log(s)
        for c in range(C):
            accumulate(c, load(c) - lse)
    else:
        # Large class counts: bound code size with fori_loop + moderate unroll.
        m = lax.fori_loop(1, C, lambda c, m: jnp.maximum(m, load(c)), load(0),
                          unroll=8)
        s = lax.fori_loop(0, C, lambda c, s: s + jnp.exp(load(c) - m),
                          jnp.zeros_like(m), unroll=8)
        lse = m + jnp.log(s)

        def body(c, carry):
            accumulate(c, load(c) - lse)
            return carry

        lax.fori_loop(0, C, body, 0, unroll=4)

    @pl.when(t == pl.num_programs(2) - 1)
    def _():
        def collapse(ref):
            v = ref[...]                                   # (C, sub, 128)
            return jnp.sum(jnp.sum(v, axis=-1), axis=-1)   # (C,)

        out_ref[0, :] = collapse(cnt_s_ref)
        out_ref[1, :] = collapse(sum_s_ref)
        out_ref[2, :] = collapse(cnt_a_ref)
        out_ref[3, :] = collapse(sum_a_ref)


def _choose_tile_rows(rows, num_classes, itemsize, max_rows):
    """Largest spatial tile (rows of 128 pixels) fitting this chip's VMEM."""
    try:
        vmem_cap = int(pltpu.get_tpu_info().vmem_capacity_bytes)
    except Exception:                      # conservative fallback = v7x-sized VMEM
        vmem_cap = 64 << 20
    if rows < SUBLANES:
        return rows, 1, vmem_cap           # tiny spatial: one full-extent tile
    # Per step: double-buffered (logits + packed target) blocks, ~12 (r,128)
    # f32 body temporaries, plus the 4*(C,8,128) f32 accumulators + headroom.
    scratch_bytes = 4 * num_classes * SUBLANES * LANES * 4
    per_row_bytes = LANES * (2 * (num_classes * itemsize + 4) + 12 * 4)
    avail = vmem_cap // 2 - scratch_bytes - (4 << 20)
    r = avail // per_row_bytes if per_row_bytes > 0 else max_rows
    r = max(SUBLANES, min(int(r), int(max_rows)))
    r = (r // SUBLANES) * SUBLANES
    r = min(r, (rows // SUBLANES) * SUBLANES)
    return max(SUBLANES, r), SUBLANES, vmem_cap


def joint_edge_seg_loss(logits, segmask, edgemask, *, num_classes,
                        upper_bound=1.0, max_tile_rows=512):
    """JointEdgeSegLoss forward.  logits (N,C,H,W) f32/bf16, segmask (N,H,W) int,
    edgemask (N,E,H,W) float.  Returns scalar seg_loss + att_loss."""
    N, C, H, W = logits.shape
    assert C == num_classes
    HW = H * W
    rows = -(-HW // LANES)
    lane_pad = rows * LANES - HW

    x = logits.reshape(N, C, HW)                 # native dtype: no astype copy
    seg = segmask.reshape(N, HW).astype(jnp.int32)
    gate = (jnp.max(edgemask, axis=1) > 0).reshape(N, HW).astype(jnp.int32)
    packed = jnp.bitwise_or(seg, jnp.left_shift(gate, 16))   # 4 B/pixel target stream
    if lane_pad:
        # TODO(synk): lane-unaligned H*W still costs one extra HBM copy of the
        # logits here; padded pixels are masked out in-kernel.
        x = jnp.pad(x, ((0, 0), (0, 0), (0, lane_pad)))
        packed = jnp.pad(packed, ((0, 0), (0, lane_pad)))
    x = x.reshape(N, C, rows, LANES)
    packed = packed.reshape(N, rows, LANES)

    r_tile, sub, vmem_cap = _choose_tile_rows(rows, C, x.dtype.itemsize,
                                              max_tile_rows)
    num_tiles = -(-rows // r_tile)
    halves = 2 if num_tiles >= 2 else 1          # spatial 'parallel' split (v7x, small N)
    tiles_per_half = -(-num_tiles // halves)
    needs_mask = (halves * tiles_per_half * r_tile * LANES) != HW

    def tile_idx(h, t):
        # Clamp phantom tiles (odd tile counts / second half) to a valid block;
        # their contribution is masked out in-kernel via the pixel-index mask.
        return jnp.minimum(h * tiles_per_half + t, num_tiles - 1)

    # Exact VMEM budget: double-buffered inputs + scratch + body temporaries.
    x_blk = C * r_tile * LANES * x.dtype.itemsize
    tg_blk = r_tile * LANES * 4
    scratch_bytes = 4 * C * sub * LANES * 4
    temp_bytes = 12 * r_tile * LANES * 4
    vmem_limit = 2 * (x_blk + tg_blk) + scratch_bytes + temp_bytes + (6 << 20)
    vmem_limit = int(max(16 << 20, min(vmem_limit, int(vmem_cap * 0.9))))

    kernel = functools.partial(
        _joint_edge_stats_kernel, num_classes=C, r_tile=r_tile, sub=sub,
        tiles_per_half=tiles_per_half, hw=HW, needs_mask=needs_mask)

    stats = pl.pallas_call(
        kernel,
        out_shape=jax.ShapeDtypeStruct((N, halves, 4, C), jnp.float32),
        grid_spec=pltpu.PrefetchScalarGridSpec(
            num_scalar_prefetch=0,
            grid=(N, halves, tiles_per_half),
            in_specs=[
                pl.BlockSpec((None, C, r_tile, LANES),
                             lambda b, h, t: (b, 0, tile_idx(h, t), 0)),
                pl.BlockSpec((None, r_tile, LANES),
                             lambda b, h, t: (b, tile_idx(h, t), 0)),
            ],
            out_specs=pl.BlockSpec((None, None, 4, C),
                                   lambda b, h, t: (b, h, 0, 0)),
            scratch_shapes=[pltpu.VMEM((C, sub, LANES), jnp.float32)
                            for _ in range(4)],
        ),
        compiler_params=pltpu.CompilerParams(
            dimension_semantics=("parallel", "parallel", "arbitrary"),
            vmem_limit_bytes=vmem_limit,
        ),
    )(x, packed)

    # Tiny per-image finalize in exact f32 (histogram weights + weighted NLL).
    stats = jnp.sum(stats, axis=1)               # merge spatial halves -> (N, 4, C)
    cnt_s, sum_s = stats[:, 0], stats[:, 1]
    cnt_a, sum_a = stats[:, 2], stats[:, 3]

    def per_image_loss(cnt, sm):
        total = jnp.sum(cnt, axis=-1, keepdims=True)
        hist = cnt / jnp.maximum(total, 1.0)
        w = jnp.where(cnt > 0.0, upper_bound * (1.0 - hist), 0.0) + 1.0
        num = jnp.sum(w * sm, axis=-1)
        den = jnp.sum(w * cnt, axis=-1)
        # NLLLoss2d(size_average=True): -sum(w*logp)/sum(w).  An image with no
        # valid pixels would be NaN in PyTorch; we return 0 (documented deviation).
        return jnp.where(den > 0.0, -num / jnp.maximum(den, 1.0), 0.0)

    return (jnp.sum(per_image_loss(cnt_s, sum_s))
            + jnp.sum(per_image_loss(cnt_a, sum_a)))


def main_aux_loss(inputs, targets, *, num_classes, aux_weight, upper_bound=1.0):
    """MainAuxLoss.forward for loss_type='jointedge'."""
    # TODO(synk): only the default loss_type='jointedge' path is implemented;
    # the 'entropy' (plain CrossEntropyLoss) branch is not.
    if not isinstance(inputs, (tuple, list)):
        inputs = (inputs,)
    if not isinstance(aux_weight, (tuple, list)):
        aux_weight = [aux_weight]
    segmask, edgemask = targets
    loss = joint_edge_seg_loss(inputs[0], segmask, edgemask,
                               num_classes=num_classes, upper_bound=upper_bound)
    for i, aux in enumerate(inputs[1:]):
        loss = loss + aux_weight[i] * joint_edge_seg_loss(
            aux, segmask, edgemask,
            num_classes=num_classes, upper_bound=upper_bound)
    return loss


# ---------------------------------------------------------------------------
# Pure-numpy reference mirroring the PyTorch module.
# ---------------------------------------------------------------------------
def _ref_joint_edge_seg_loss(x, seg, edge, num_classes, upper_bound=1.0):
    x = np.asarray(x, np.float32)
    seg = np.asarray(seg).astype(np.int64)
    edge = np.asarray(edge, np.float32)
    N, C, H, W = x.shape

    def per_image(logits, target):
        m = logits.max(axis=0, keepdims=True)
        lp = logits - m - np.log(np.exp(logits - m).sum(axis=0, keepdims=True))
        lp = lp.reshape(C, -1)
        t = target.reshape(-1)
        counts, _ = np.histogram(t, bins=list(range(num_classes + 1)))
        hist = counts / counts.sum()
        w = (hist != 0) * upper_bound * (1 - hist) + 1
        num = 0.0
        den = 0.0
        for p in range(t.size):
            if t[p] != IGNORE_INDEX:
                num += w[t[p]] * lp[t[p], p]
                den += w[t[p]]
        return -num / den

    seg_loss = sum(per_image(x[i], seg[i]) for i in range(N))
    att_t = np.where(edge.max(axis=1) > 0, seg, IGNORE_INDEX)
    att_loss = sum(per_image(x[i], att_t[i]) for i in range(N))
    return seg_loss + att_loss


def _ref_main_aux_loss(inputs, segmask, edgemask, num_classes, aux_weight,
                       upper_bound=1.0):
    loss = _ref_joint_edge_seg_loss(inputs[0], segmask, edgemask,
                                    num_classes, upper_bound)
    for i, aux in enumerate(inputs[1:]):
        loss += aux_weight[i] * _ref_joint_edge_seg_loss(
            aux, segmask, edgemask, num_classes, upper_bound)
    return loss


if __name__ == "__main__":
    num_classes = 4
    aux_weight = [0.4]

    def make_inputs(key, n, c, h, w, e):
        k1, k2, k3, k4, k5 = jax.random.split(key, 5)
        main_logits = jax.random.normal(k1, (n, c, h, w), dtype=jnp.float32)
        aux_logits = jax.random.normal(k2, (n, c, h, w), dtype=jnp.float32)
        seg_raw = jax.random.randint(k3, (n, h, w), 0, c, dtype=jnp.int32)
        segmask = jnp.where(jax.random.uniform(k4, (n, h, w)) < 0.1,
                            jnp.int32(IGNORE_INDEX), seg_raw)
        edgemask = jax.random.uniform(k5, (n, e, h, w), dtype=jnp.float32) - 0.5
        return main_logits, aux_logits, segmask, edgemask

    # Main check: small canonical shape (single tile path).
    main_logits, aux_logits, segmask, edgemask = make_inputs(
        jax.random.PRNGKey(0), 2, num_classes, 16, 16, 2)
    loss = main_aux_loss((main_logits, aux_logits), (segmask, edgemask),
                         num_classes=num_classes, aux_weight=aux_weight)
    loss = jax.block_until_ready(loss)
    ref = _ref_main_aux_loss(
        [np.asarray(main_logits), np.asarray(aux_logits)],
        np.asarray(segmask), np.asarray(edgemask), num_classes, aux_weight)
    np.testing.assert_allclose(np.float32(loss), np.float32(ref),
                               rtol=5e-3, atol=5e-3)

    # Extra shape checks: exercise the multi-tile / spatial-halves / ragged-tail
    # masking path (48x48) and the lane-pad fallback path (20x20).
    for (h2, w2), sub_key in zip([(48, 48), (20, 20)],
                                 jax.random.split(jax.random.PRNGKey(1), 2)):
        ml, al, sm, em = make_inputs(sub_key, 2, num_classes, h2, w2, 2)
        loss2 = jax.block_until_ready(main_aux_loss(
            (ml, al), (sm, em), num_classes=num_classes, aux_weight=aux_weight))
        ref2 = _ref_main_aux_loss([np.asarray(ml), np.asarray(al)],
                                  np.asarray(sm), np.asarray(em),
                                  num_classes, aux_weight)
        np.testing.assert_allclose(np.float32(loss2), np.float32(ref2),
                                   rtol=5e-3, atol=5e-3)

    print("KERNEL_OK")
</pallas_src>

<mosaic_0001>
module attributes {stable_mosaic.version = 11 : i64} {
  func.func @_joint_edge_stats_kernel(%arg0: i32, %arg1: i32, %arg2: i32, %arg3: memref<1x4x2x128xf32, #tpu.memory_space<vmem>>, %arg4: memref<1x2x128xi32, #tpu.memory_space<vmem>>, %arg5: memref<1x1x4x4xf32, #tpu.memory_space<vmem>>, %arg6: memref<4x1x128xf32, #tpu.memory_space<vmem>>, %arg7: memref<4x1x128xf32, #tpu.memory_space<vmem>>, %arg8: memref<4x1x128xf32, #tpu.memory_space<vmem>>, %arg9: memref<4x1x128xf32, #tpu.memory_space<vmem>>) attributes {dimension_semantics = [#tpu.dimension_semantics<parallel>, #tpu.dimension_semantics<parallel>, #tpu.dimension_semantics<arbitrary>], iteration_bounds = array<i64: 2, 1, 1>, scalar_prefetch = 0 : i64, scratch_operands = 4 : i64, tpu.core_type = #tpu.core_type<tc>, window_params = [{transform_indices = @transform_0, window_bounds = array<i64: 1, 4, 2, 128>}, {transform_indices = @transform_1, window_bounds = array<i64: 1, 2, 128>}, {transform_indices = @transform_2, window_bounds = array<i64: 1, 1, 4, 4>}]} {
    %c0_i32 = arith.constant 0 : i32
    %0 = arith.cmpi eq, %arg2, %c0_i32 : i32
    %1 = arith.extui %0 : i1 to i32
    %c0_i32_0 = arith.constant 0 : i32
    %2 = arith.cmpi ne, %1, %c0_i32_0 : i32
    scf.if %2 {
      %cst_174 = arith.constant 0.000000e+00 : f32
      %221 = vector.broadcast %cst_174 : f32 to vector<4x1x128xf32>
      %c0_175 = arith.constant 0 : index
      %c0_176 = arith.constant 0 : index
      %c0_177 = arith.constant 0 : index
      %222 = vector.load %arg6[%c0_175, %c0_176, %c0_177] : memref<4x1x128xf32, #tpu.memory_space<vmem>>, vector<4x1x128xf32>
      tpu.vector_store %arg6[%c0_175, %c0_176, %c0_177], %221 {strides = array<i32>} : memref<4x1x128xf32, #tpu.memory_space<vmem>>, vector<4x1x128xf32>,
      %cst_178 = arith.constant 0.000000e+00 : f32
      %223 = vector.broadcast %cst_178 : f32 to vector<4x1x128xf32>
      %c0_179 = arith.constant 0 : index
      %c0_180 = arith.constant 0 : index
      %c0_181 = arith.constant 0 : index
      %224 = vector.load %arg7[%c0_179, %c0_180, %c0_181] : memref<4x1x128xf32, #tpu.memory_space<vmem>>, vector<4x1x128xf32>
      tpu.vector_store %arg7[%c0_179, %c0_180, %c0_181], %223 {strides = array<i32>} : memref<4x1x128xf32, #tpu.memory_space<vmem>>, vector<4x1x128xf32>,
      %cst_182 = arith.constant 0.000000e+00 : f32
      %225 = vector.broadcast %cst_182 : f32 to vector<4x1x128xf32>
      %c0_183 = arith.constant 0 : index
      %c0_184 = arith.constant 0 : index
      %c0_185 = arith.constant 0 : index
      %226 = vector.load %arg8[%c0_183, %c0_184, %c0_185] : memref<4x1x128xf32, #tpu.memory_space<vmem>>, vector<4x1x128xf32>
      tpu.vector_store %arg8[%c0_183, %c0_184, %c0_185], %225 {strides = array<i32>} : memref<4x1x128xf32, #tpu.memory_space<vmem>>, vector<4x1x128xf32>,
      %cst_186 = arith.constant 0.000000e+00 : f32
      %227 = vector.broadcast %cst_186 : f32 to vector<4x1x128xf32>
      %c0_187 = arith.constant 0 : index
      %c0_188 = arith.constant 0 : index
      %c0_189 = arith.constant 0 : index
      %228 = vector.load %arg9[%c0_187, %c0_188, %c0_189] : memref<4x1x128xf32, #tpu.memory_space<vmem>>, vector<4x1x128xf32>
      tpu.vector_store %arg9[%c0_187, %c0_188, %c0_189], %227 {strides = array<i32>} : memref<4x1x128xf32, #tpu.memory_space<vmem>>, vector<4x1x128xf32>,
    } else {
    }
    %c0 = arith.constant 0 : index
    %c0_1 = arith.constant 0 : index
    %c0_2 = arith.constant 0 : index
    %3 = vector.load %arg4[%c0, %c0_1, %c0_2] : memref<1x2x128xi32, #tpu.memory_space<vmem>>, vector<1x2x128xi32>
    %4 = vector.shape_cast %3 : vector<1x2x128xi32> to vector<2x128xi32>
    %c65535_i32 = arith.constant 65535 : i32
    %5 = vector.broadcast %c65535_i32 : i32 to vector<2x128xi32>
    %6 = arith.andi %4, %5 : vector<2x128xi32>
    %c16_i32 = arith.constant 16 : i32
    %7 = vector.broadcast %c16_i32 : i32 to vector<2x128xi32>
    %8 = arith.shrsi %4, %7 : vector<2x128xi32>
    %9 = arith.sitofp %8 : vector<2x128xi32> to vector<2x128xf32>
    %c0_3 = arith.constant 0 : index
    %c0_4 = arith.constant 0 : index
    %c0_5 = arith.constant 0 : index
    %c0_6 = arith.constant 0 : index
    %10 = vector.load %arg3[%c0_3, %c0_4, %c0_5, %c0_6] : memref<1x4x2x128xf32, #tpu.memory_space<vmem>>, vector<1x1x2x128xf32>
    %11 = vector.shape_cast %10 : vector<1x1x2x128xf32> to vector<2x128xf32>
    %c0_7 = arith.constant 0 : index
    %c1 = arith.constant 1 : index
    %c0_8 = arith.constant 0 : index
    %c0_9 = arith.constant 0 : index
    %12 = vector.load %arg3[%c0_7, %c1, %c0_8, %c0_9] : memref<1x4x2x128xf32, #tpu.memory_space<vmem>>, vector<1x1x2x128xf32>
    %13 = vector.shape_cast %12 : vector<1x1x2x128xf32> to vector<2x128xf32>
    %14 = arith.maximumf %11, %13 : vector<2x128xf32>
    %c0_10 = arith.constant 0 : index
    %c2 = arith.constant 2 : index
    %c0_11 = arith.constant 0 : index
    %c0_12 = arith.constant 0 : index
    %15 = vector.load %arg3[%c0_10, %c2, %c0_11, %c0_12] : memref<1x4x2x128xf32, #tpu.memory_space<vmem>>, vector<1x1x2x128xf32>
    %16 = vector.shape_cast %15 : vector<1x1x2x128xf32> to vector<2x128xf32>
    %17 = arith.maximumf %14, %16 : vector<2x128xf32>
    %c0_13 = arith.constant 0 : index
    %c3 = arith.constant 3 : index
    %c0_14 = arith.constant 0 : index
    %c0_15 = arith.constant 0 : index
    %18 = vector.load %arg3[%c0_13, %c3, %c0_14, %c0_15] : memref<1x4x2x128xf32, #tpu.memory_space<vmem>>, vector<1x1x2x128xf32>
    %19 = vector.shape_cast %18 : vector<1x1x2x128xf32> to vector<2x128xf32>
    %20 = arith.maximumf %17, %19 : vector<2x128xf32>
    %c0_16 = arith.constant 0 : index
    %c0_17 = arith.constant 0 : index
    %c0_18 = arith.constant 0 : index
    %c0_19 = arith.constant 0 : index
    %21 = vector.load %arg3[%c0_16, %c0_17, %c0_18, %c0_19] : memref<1x4x2x128xf32, #tpu.memory_space<vmem>>, vector<1x1x2x128xf32>
    %22 = vector.shape_cast %21 : vector<1x1x2x128xf32> to vector<2x128xf32>
    %23 = arith.subf %22, %20 : vector<2x128xf32>
    %24 = math.exp %23 : vector<2x128xf32>
    %c0_20 = arith.constant 0 : index
    %c1_21 = arith.constant 1 : index
    %c0_22 = arith.constant 0 : index
    %c0_23 = arith.constant 0 : index
    %25 = vector.load %arg3[%c0_20, %c1_21, %c0_22, %c0_23] : memref<1x4x2x128xf32, #tpu.memory_space<vmem>>, vector<1x1x2x128xf32>
    %26 = vector.shape_cast %25 : vector<1x1x2x128xf32> to vector<2x128xf32>
    %27 = arith.subf %26, %20 : vector<2x128xf32>
    %28 = math.exp %27 : vector<2x128xf32>
    %29 = arith.addf %24, %28 : vector<2x128xf32>
    %c0_24 = arith.constant 0 : index
    %c2_25 = arith.constant 2 : index
    %c0_26 = arith.constant 0 : index
    %c0_27 = arith.constant 0 : index
    %30 = vector.load %arg3[%c0_24, %c2_25, %c0_26, %c0_27] : memref<1x4x2x128xf32, #tpu.memory_space<vmem>>, vector<1x1x2x128xf32>
    %31 = vector.shape_cast %30 : vector<1x1x2x128xf32> to vector<2x128xf32>
    %32 = arith.subf %31, %20 : vector<2x128xf32>
    %33 = math.exp %32 : vector<2x128xf32>
    %34 = arith.addf %29, %33 : vector<2x128xf32>
    %c0_28 = arith.constant 0 : index
    %c3_29 = arith.constant 3 : index
    %c0_30 = arith.constant 0 : index
    %c0_31 = arith.constant 0 : index
    %35 = vector.load %arg3[%c0_28, %c3_29, %c0_30, %c0_31] : memref<1x4x2x128xf32, #tpu.memory_space<vmem>>, vector<1x1x2x128xf32>
    %36 = vector.shape_cast %35 : vector<1x1x2x128xf32> to vector<2x128xf32>
    %37 = arith.subf %36, %20 : vector<2x128xf32>
    %38 = math.exp %37 : vector<2x128xf32>
    %39 = arith.addf %34, %38 : vector<2x128xf32>
    %40 = math.log %39 : vector<2x128xf32>
    %41 = arith.addf %20, %40 : vector<2x128xf32>
    %c0_32 = arith.constant 0 : index
    %c0_33 = arith.constant 0 : index
    %c0_34 = arith.constant 0 : index
    %c0_35 = arith.constant 0 : index
    %42 = vector.load %arg3[%c0_32, %c0_33, %c0_34, %c0_35] : memref<1x4x2x128xf32, #tpu.memory_space<vmem>>, vector<1x1x2x128xf32>
    %43 = vector.shape_cast %42 : vector<1x1x2x128xf32> to vector<2x128xf32>
    %44 = arith.subf %43, %41 : vector<2x128xf32>
    %c0_i32_36 = arith.constant 0 : i32
    %45 = vector.broadcast %c0_i32_36 : i32 to vector<2x128xi32>
    %46 = arith.cmpi eq, %6, %45 : vector<2x128xi32>
    %cst = arith.constant 1.000000e+00 : f32
    %cst_37 = arith.constant 0.000000e+00 : f32
    %47 = vector.broadcast %cst : f32 to vector<2x128xf32>
    %48 = vector.broadcast %cst_37 : f32 to vector<2x128xf32>
    %49 = arith.select %46, %47, %48 : vector<2x128xi1>, vector<2x128xf32>
    %cst_38 = arith.constant 0.000000e+00 : f32
    %50 = vector.broadcast %cst_38 : f32 to vector<2x128xf32>
    %51 = arith.select %46, %44, %50 : vector<2x128xi1>, vector<2x128xf32>
    %c0_39 = arith.constant 0 : index
    %c0_40 = arith.constant 0 : index
    %c0_41 = arith.constant 0 : index
    %52 = vector.load %arg6[%c0_39, %c0_40, %c0_41] : memref<4x1x128xf32, #tpu.memory_space<vmem>>, vector<1x1x128xf32>
    %53 = vector.shape_cast %52 : vector<1x1x128xf32> to vector<1x128xf32>
    %cst_42 = arith.constant dense<0.000000e+00> : vector<128xf32>
    %54 = vector.multi_reduction <add>, %49, %cst_42 [0] : vector<2x128xf32> to vector<128xf32>
    %55 = vector.shape_cast %54 : vector<128xf32> to vector<1x128xf32>
    %56 = arith.addf %53, %55 : vector<1x128xf32>
    %c0_43 = arith.constant 0 : index
    %c0_44 = arith.constant 0 : index
    %c0_45 = arith.constant 0 : index
    %57 = vector.load %arg6[%c0_43, %c0_44, %c0_45] : memref<4x1x128xf32, #tpu.memory_space<vmem>>, vector<1x1x128xf32>
    %58 = vector.shape_cast %57 : vector<1x1x128xf32> to vector<1x128xf32>
    %59 = vector.shape_cast %56 : vector<1x128xf32> to vector<1x1x128xf32>
    tpu.vector_store %arg6[%c0_43, %c0_44, %c0_45], %59 {strides = array<i32>} : memref<4x1x128xf32, #tpu.memory_space<vmem>>, vector<1x1x128xf32>,
    %c0_46 = arith.constant 0 : index
    %c0_47 = arith.constant 0 : index
    %c0_48 = arith.constant 0 : index
    %60 = vector.load %arg7[%c0_46, %c0_47, %c0_48] : memref<4x1x128xf32, #tpu.memory_space<vmem>>, vector<1x1x128xf32>
    %61 = vector.shape_cast %60 : vector<1x1x128xf32> to vector<1x128xf32>
    %cst_49 = arith.constant dense<0.000000e+00> : vector<128xf32>
    %62 = vector.multi_reduction <add>, %51, %cst_49 [0] : vector<2x128xf32> to vector<128xf32>
    %63 = vector.shape_cast %62 : vector<128xf32> to vector<1x128xf32>
    %64 = arith.addf %61, %63 : vector<1x128xf32>
    %c0_50 = arith.constant 0 : index
    %c0_51 = arith.constant 0 : index
    %c0_52 = arith.constant 0 : index
    %65 = vector.load %arg7[%c0_50, %c0_51, %c0_52] : memref<4x1x128xf32, #tpu.memory_space<vmem>>, vector<1x1x128xf32>
    %66 = vector.shape_cast %65 : vector<1x1x128xf32> to vector<1x128xf32>
    %67 = vector.shape_cast %64 : vector<1x128xf32> to vector<1x1x128xf32>
    tpu.vector_store %arg7[%c0_50, %c0_51, %c0_52], %67 {strides = array<i32>} : memref<4x1x128xf32, #tpu.memory_space<vmem>>, vector<1x1x128xf32>,
    %c0_53 = arith.constant 0 : index
    %c0_54 = arith.constant 0 : index
    %c0_55 = arith.constant 0 : index
    %68 = vector.load %arg8[%c0_53, %c0_54, %c0_55] : memref<4x1x128xf32, #tpu.memory_space<vmem>>, vector<1x1x128xf32>
    %69 = vector.shape_cast %68 : vector<1x1x128xf32> to vector<1x128xf32>
    %70 = arith.mulf %9, %49 : vector<2x128xf32>
    %cst_56 = arith.constant dense<0.000000e+00> : vector<128xf32>
    %71 = vector.multi_reduction <add>, %70, %cst_56 [0] : vector<2x128xf32> to vector<128xf32>
    %72 = vector.shape_cast %71 : vector<128xf32> to vector<1x128xf32>
    %73 = arith.addf %69, %72 : vector<1x128xf32>
    %c0_57 = arith.constant 0 : index
    %c0_58 = arith.constant 0 : index
    %c0_59 = arith.constant 0 : index
    %74 = vector.load %arg8[%c0_57, %c0_58, %c0_59] : memref<4x1x128xf32, #tpu.memory_space<vmem>>, vector<1x1x128xf32>
    %75 = vector.shape_cast %74 : vector<1x1x128xf32> to vector<1x128xf32>
    %76 = vector.shape_cast %73 : vector<1x128xf32> to vector<1x1x128xf32>
    tpu.vector_store %arg8[%c0_57, %c0_58, %c0_59], %76 {strides = array<i32>} : memref<4x1x128xf32, #tpu.memory_space<vmem>>, vector<1x1x128xf32>,
    %c0_60 = arith.constant 0 : index
    %c0_61 = arith.constant 0 : index
    %c0_62 = arith.constant 0 : index
    %77 = vector.load %arg9[%c0_60, %c0_61, %c0_62] : memref<4x1x128xf32, #tpu.memory_space<vmem>>, vector<1x1x128xf32>
    %78 = vector.shape_cast %77 : vector<1x1x128xf32> to vector<1x128xf32>
    %79 = arith.mulf %9, %51 : vector<2x128xf32>
    %cst_63 = arith.constant dense<0.000000e+00> : vector<128xf32>
    %80 = vector.multi_reduction <add>, %79, %cst_63 [0] : vector<2x128xf32> to vector<128xf32>
    %81 = vector.shape_cast %80 : vector<128xf32> to vector<1x128xf32>
    %82 = arith.addf %78, %81 : vector<1x128xf32>
    %c0_64 = arith.constant 0 : index
    %c0_65 = arith.constant 0 : index
    %c0_66 = arith.constant 0 : index
    %83 = vector.load %arg9[%c0_64, %c0_65, %c0_66] : memref<4x1x128xf32, #tpu.memory_space<vmem>>, vector<1x1x128xf32>
    %84 = vector.shape_cast %83 : vector<1x1x128xf32> to vector<1x128xf32>
    %85 = vector.shape_cast %82 : vector<1x128xf32> to vector<1x1x128xf32>
    tpu.vector_store %arg9[%c0_64, %c0_65, %c0_66], %85 {strides = array<i32>} : memref<4x1x128xf32, #tpu.memory_space<vmem>>, vector<1x1x128xf32>,
    %c0_67 = arith.constant 0 : index
    %c1_68 = arith.constant 1 : index
    %c0_69 = arith.constant 0 : index
    %c0_70 = arith.constant 0 : index
    %86 = vector.load %arg3[%c0_67, %c1_68, %c0_69, %c0_70] : memref<1x4x2x128xf32, #tpu.memory_space<vmem>>, vector<1x1x2x128xf32>
    %87 = vector.shape_cast %86 : vector<1x1x2x128xf32> to vector<2x128xf32>
    %88 = arith.subf %87, %41 : vector<2x128xf32>
    %c1_i32 = arith.constant 1 : i32
    %89 = vector.broadcast %c1_i32 : i32 to vector<2x128xi32>
    %90 = arith.cmpi eq, %6, %89 : vector<2x128xi32>
    %cst_71 = arith.constant 1.000000e+00 : f32
    %cst_72 = arith.constant 0.000000e+00 : f32
    %91 = vector.broadcast %cst_71 : f32 to vector<2x128xf32>
    %92 = vector.broadcast %cst_72 : f32 to vector<2x128xf32>
    %93 = arith.select %90, %91, %92 : vector<2x128xi1>, vector<2x128xf32>
    %cst_73 = arith.constant 0.000000e+00 : f32
    %94 = vector.broadcast %cst_73 : f32 to vector<2x128xf32>
    %95 = arith.select %90, %88, %94 : vector<2x128xi1>, vector<2x128xf32>
    %c1_74 = arith.constant 1 : index
    %c0_75 = arith.constant 0 : index
    %c0_76 = arith.constant 0 : index
    %96 = vector.load %arg6[%c1_74, %c0_75, %c0_76] : memref<4x1x128xf32, #tpu.memory_space<vmem>>, vector<1x1x128xf32>
    %97 = vector.shape_cast %96 : vector<1x1x128xf32> to vector<1x128xf32>
    %cst_77 = arith.constant dense<0.000000e+00> : vector<128xf32>
    %98 = vector.multi_reduction <add>, %93, %cst_77 [0] : vector<2x128xf32> to vector<128xf32>
    %99 = vector.shape_cast %98 : vector<128xf32> to vector<1x128xf32>
    %100 = arith.addf %97, %99 : vector<1x128xf32>
    %c1_78 = arith.constant 1 : index
    %c0_79 = arith.constant 0 : index
    %c0_80 = arith.constant 0 : index
    %101 = vector.load %arg6[%c1_78, %c0_79, %c0_80] : memref<4x1x128xf32, #tpu.memory_space<vmem>>, vector<1x1x128xf32>
    %102 = vector.shape_cast %101 : vector<1x1x128xf32> to vector<1x128xf32>
    %103 = vector.shape_cast %100 : vector<1x128xf32> to vector<1x1x128xf32>
    tpu.vector_store %arg6[%c1_78, %c0_79, %c0_80], %103 {strides = array<i32>} : memref<4x1x128xf32, #tpu.memory_space<vmem>>, vector<1x1x128xf32>,
    %c1_81 = arith.constant 1 : index
    %c0_82 = arith.constant 0 : index
    %c0_83 = arith.constant 0 : index
    %104 = vector.load %arg7[%c1_81, %c0_82, %c0_83] : memref<4x1x128xf32, #tpu.memory_space<vmem>>, vector<1x1x128xf32>
    %105 = vector.shape_cast %104 : vector<1x1x128xf32> to vector<1x128xf32>
    %cst_84 = arith.constant dense<0.000000e+00> : vector<128xf32>
    %106 = vector.multi_reduction <add>, %95, %cst_84 [0] : vector<2x128xf32> to vector<128xf32>
    %107 = vector.shape_cast %106 : vector<128xf32> to vector<1x128xf32>
    %108 = arith.addf %105, %107 : vector<1x128xf32>
    %c1_85 = arith.constant 1 : index
    %c0_86 = arith.constant 0 : index
    %c0_87 = arith.constant 0 : index
    %109 = vector.load %arg7[%c1_85, %c0_86, %c0_87] : memref<4x1x128xf32, #tpu.memory_space<vmem>>, vector<1x1x128xf32>
    %110 = vector.shape_cast %109 : vector<1x1x128xf32> to vector<1x128xf32>
    %111 = vector.shape_cast %108 : vector<1x128xf32> to vector<1x1x128xf32>
    tpu.vector_store %arg7[%c1_85, %c0_86, %c0_87], %111 {strides = array<i32>} : memref<4x1x128xf32, #tpu.memory_space<vmem>>, vector<1x1x128xf32>,
    %c1_88 = arith.constant 1 : index
    %c0_89 = arith.constant 0 : index
    %c0_90 = arith.constant 0 : index
    %112 = vector.load %arg8[%c1_88, %c0_89, %c0_90] : memref<4x1x128xf32, #tpu.memory_space<vmem>>, vector<1x1x128xf32>
    %113 = vector.shape_cast %112 : vector<1x1x128xf32> to vector<1x128xf32>
    %114 = arith.mulf %9, %93 : vector<2x128xf32>
    %cst_91 = arith.constant dense<0.000000e+00> : vector<128xf32>
    %115 = vector.multi_reduction <add>, %114, %cst_91 [0] : vector<2x128xf32> to vector<128xf32>
    %116 = vector.shape_cast %115 : vector<128xf32> to vector<1x128xf32>
    %117 = arith.addf %113, %116 : vector<1x128xf32>
    %c1_92 = arith.constant 1 : index
    %c0_93 = arith.constant 0 : index
    %c0_94 = arith.constant 0 : index
    %118 = vector.load %arg8[%c1_92, %c0_93, %c0_94] : memref<4x1x128xf32, #tpu.memory_space<vmem>>, vector<1x1x128xf32>
    %119 = vector.shape_cast %118 : vector<1x1x128xf32> to vector<1x128xf32>
    %120 = vector.shape_cast %117 : vector<1x128xf32> to vector<1x1x128xf32>
    tpu.vector_store %arg8[%c1_92, %c0_93, %c0_94], %120 {strides = array<i32>} : memref<4x1x128xf32, #tpu.memory_space<vmem>>, vector<1x1x128xf32>,
    %c1_95 = arith.constant 1 : index
    %c0_96 = arith.constant 0 : index
    %c0_97 = arith.constant 0 : index
    %121 = vector.load %arg9[%c1_95, %c0_96, %c0_97] : memref<4x1x128xf32, #tpu.memory_space<vmem>>, vector<1x1x128xf32>
    %122 = vector.shape_cast %121 : vector<1x1x128xf32> to vector<1x128xf32>
    %123 = arith.mulf %9, %95 : vector<2x128xf32>
    %cst_98 = arith.constant dense<0.000000e+00> : vector<128xf32>
    %124 = vector.multi_reduction <add>, %123, %cst_98 [0] : vector<2x128xf32> to vector<128xf32>
    %125 = vector.shape_cast %124 : vector<128xf32> to vector<1x128xf32>
    %126 = arith.addf %122, %125 : vector<1x128xf32>
    %c1_99 = arith.constant 1 : index
    %c0_100 = arith.constant 0 : index
    %c0_101 = arith.constant 0 : index
    %127 = vector.load %arg9[%c1_99, %c0_100, %c0_101] : memref<4x1x128xf32, #tpu.memory_space<vmem>>, vector<1x1x128xf32>
    %128 = vector.shape_cast %127 : vector<1x1x128xf32> to vector<1x128xf32>
    %129 = vector.shape_cast %126 : vector<1x128xf32> to vector<1x1x128xf32>
    tpu.vector_store %arg9[%c1_99, %c0_100, %c0_101], %129 {strides = array<i32>} : memref<4x1x128xf32, #tpu.memory_space<vmem>>, vector<1x1x128xf32>,
    %c0_102 = arith.constant 0 : index
    %c2_103 = arith.constant 2 : index
    %c0_104 = arith.constant 0 : index
    %c0_105 = arith.constant 0 : index
    %130 = vector.load %arg3[%c0_102, %c2_103, %c0_104, %c0_105] : memref<1x4x2x128xf32, #tpu.memory_space<vmem>>, vector<1x1x2x128xf32>
    %131 = vector.shape_cast %130 : vector<1x1x2x128xf32> to vector<2x128xf32>
    %132 = arith.subf %131, %41 : vector<2x128xf32>
    %c2_i32 = arith.constant 2 : i32
    %133 = vector.broadcast %c2_i32 : i32 to vector<2x128xi32>
    %134 = arith.cmpi eq, %6, %133 : vector<2x128xi32>
    %cst_106 = arith.constant 1.000000e+00 : f32
    %cst_107 = arith.constant 0.000000e+00 : f32
    %135 = vector.broadcast %cst_106 : f32 to vector<2x128xf32>
    %136 = vector.broadcast %cst_107 : f32 to vector<2x128xf32>
    %137 = arith.select %134, %135, %136 : vector<2x128xi1>, vector<2x128xf32>
    %cst_108 = arith.constant 0.000000e+00 : f32
    %138 = vector.broadcast %cst_108 : f32 to vector<2x128xf32>
    %139 = arith.select %134, %132, %138 : vector<2x128xi1>, vector<2x128xf32>
    %c2_109 = arith.constant 2 : index
    %c0_110 = arith.constant 0 : index
    %c0_111 = arith.constant 0 : index
    %140 = vector.load %arg6[%c2_109, %c0_110, %c0_111] : memref<4x1x128xf32, #tpu.memory_space<vmem>>, vector<1x1x128xf32>
    %141 = vector.shape_cast %140 : vector<1x1x128xf32> to vector<1x128xf32>
    %cst_112 = arith.constant dense<0.000000e+00> : vector<128xf32>
    %142 = vector.multi_reduction <add>, %137, %cst_112 [0] : vector<2x128xf32> to vector<128xf32>
    %143 = vector.shape_cast %142 : vector<128xf32> to vector<1x128xf32>
    %144 = arith.addf %141, %143 : vector<1x128xf32>
    %c2_113 = arith.constant 2 : index
    %c0_114 = arith.constant 0 : index
    %c0_115 = arith.constant 0 : index
    %145 = vector.load %arg6[%c2_113, %c0_114, %c0_115] : memref<4x1x128xf32, #tpu.memory_space<vmem>>, vector<1x1x128xf32>
    %146 = vector.shape_cast %145 : vector<1x1x128xf32> to vector<1x128xf32>
    %147 = vector.shape_cast %144 : vector<1x128xf32> to vector<1x1x128xf32>
    tpu.vector_store %arg6[%c2_113, %c0_114, %c0_115], %147 {strides = array<i32>} : memref<4x1x128xf32, #tpu.memory_space<vmem>>, vector<1x1x128xf32>,
    %c2_116 = arith.constant 2 : index
    %c0_117 = arith.constant 0 : index
    %c0_118 = arith.constant 0 : index
    %148 = vector.load %arg7[%c2_116, %c0_117, %c0_118] : memref<4x1x128xf32, #tpu.memory_space<vmem>>, vector<1x1x128xf32>
    %149 = vector.shape_cast %148 : vector<1x1x128xf32> to vector<1x128xf32>
    %cst_119 = arith.constant dense<0.000000e+00> : vector<128xf32>
    %150 = vector.multi_reduction <add>, %139, %cst_119 [0] : vector<2x128xf32> to vector<128xf32>
    %151 = vector.shape_cast %150 : vector<128xf32> to vector<1x128xf32>
    %152 = arith.addf %149, %151 : vector<1x128xf32>
    %c2_120 = arith.constant 2 : index
    %c0_121 = arith.constant 0 : index
    %c0_122 = arith.constant 0 : index
    %153 = vector.load %arg7[%c2_120, %c0_121, %c0_122] : memref<4x1x128xf32, #tpu.memory_space<vmem>>, vector<1x1x128xf32>
    %154 = vector.shape_cast %153 : vector<1x1x128xf32> to vector<1x128xf32>
    %155 = vector.shape_cast %152 : vector<1x128xf32> to vector<1x1x128xf32>
    tpu.vector_store %arg7[%c2_120, %c0_121, %c0_122], %155 {strides = array<i32>} : memref<4x1x128xf32, #tpu.memory_space<vmem>>, vector<1x1x128xf32>,
    %c2_123 = arith.constant 2 : index
    %c0_124 = arith.constant 0 : index
    %c0_125 = arith.constant 0 : index
    %156 = vector.load %arg8[%c2_123, %c0_124, %c0_125] : memref<4x1x128xf32, #tpu.memory_space<vmem>>, vector<1x1x128xf32>
    %157 = vector.shape_cast %156 : vector<1x1x128xf32> to vector<1x128xf32>
    %158 = arith.mulf %9, %137 : vector<2x128xf32>
    %cst_126 = arith.constant dense<0.000000e+00> : vector<128xf32>
    %159 = vector.multi_reduction <add>, %158, %cst_126 [0] : vector<2x128xf32> to vector<128xf32>
    %160 = vector.shape_cast %159 : vector<128xf32> to vector<1x128xf32>
    %161 = arith.addf %157, %160 : vector<1x128xf32>
    %c2_127 = arith.constant 2 : index
    %c0_128 = arith.constant 0 : index
    %c0_129 = arith.constant 0 : index
    %162 = vector.load %arg8[%c2_127, %c0_128, %c0_129] : memref<4x1x128xf32, #tpu.memory_space<vmem>>, vector<1x1x128xf32>
    %163 = vector.shape_cast %162 : vector<1x1x128xf32> to vector<1x128xf32>
    %164 = vector.shape_cast %161 : vector<1x128xf32> to vector<1x1x128xf32>
    tpu.vector_store %arg8[%c2_127, %c0_128, %c0_129], %164 {strides = array<i32>} : memref<4x1x128xf32, #tpu.memory_space<vmem>>, vector<1x1x128xf32>,
    %c2_130 = arith.constant 2 : index
    %c0_131 = arith.constant 0 : index
    %c0_132 = arith.constant 0 : index
    %165 = vector.load %arg9[%c2_130, %c0_131, %c0_132] : memref<4x1x128xf32, #tpu.memory_space<vmem>>, vector<1x1x128xf32>
    %166 = vector.shape_cast %165 : vector<1x1x128xf32> to vector<1x128xf32>
    %167 = arith.mulf %9, %139 : vector<2x128xf32>
    %cst_133 = arith.constant dense<0.000000e+00> : vector<128xf32>
    %168 = vector.multi_reduction <add>, %167, %cst_133 [0] : vector<2x128xf32> to vector<128xf32>
    %169 = vector.shape_cast %168 : vector<128xf32> to vector<1x128xf32>
    %170 = arith.addf %166, %169 : vector<1x128xf32>
    %c2_134 = arith.constant 2 : index
    %c0_135 = arith.constant 0 : index
    %c0_136 = arith.constant 0 : index
    %171 = vector.load %arg9[%c2_134, %c0_135, %c0_136] : memref<4x1x128xf32, #tpu.memory_space<vmem>>, vector<1x1x128xf32>
    %172 = vector.shape_cast %171 : vector<1x1x128xf32> to vector<1x128xf32>
    %173 = vector.shape_cast %170 : vector<1x128xf32> to vector<1x1x128xf32>
    tpu.vector_store %arg9[%c2_134, %c0_135, %c0_136], %173 {strides = array<i32>} : memref<4x1x128xf32, #tpu.memory_space<vmem>>, vector<1x1x128xf32>,
    %c0_137 = arith.constant 0 : index
    %c3_138 = arith.constant 3 : index
    %c0_139 = arith.constant 0 : index
    %c0_140 = arith.constant 0 : index
    %174 = vector.load %arg3[%c0_137, %c3_138, %c0_139, %c0_140] : memref<1x4x2x128xf32, #tpu.memory_space<vmem>>, vector<1x1x2x128xf32>
    %175 = vector.shape_cast %174 : vector<1x1x2x128xf32> to vector<2x128xf32>
    %176 = arith.subf %175, %41 : vector<2x128xf32>
    %c3_i32 = arith.constant 3 : i32
    %177 = vector.broadcast %c3_i32 : i32 to vector<2x128xi32>
    %178 = arith.cmpi eq, %6, %177 : vector<2x128xi32>
    %cst_141 = arith.constant 1.000000e+00 : f32
    %cst_142 = arith.constant 0.000000e+00 : f32
    %179 = vector.broadcast %cst_141 : f32 to vector<2x128xf32>
    %180 = vector.broadcast %cst_142 : f32 to vector<2x128xf32>
    %181 = arith.select %178, %179, %180 : vector<2x128xi1>, vector<2x128xf32>
    %cst_143 = arith.constant 0.000000e+00 : f32
    %182 = vector.broadcast %cst_143 : f32 to vector<2x128xf32>
    %183 = arith.select %178, %176, %182 : vector<2x128xi1>, vector<2x128xf32>
    %c3_144 = arith.constant 3 : index
    %c0_145 = arith.constant 0 : index
    %c0_146 = arith.constant 0 : index
    %184 = vector.load %arg6[%c3_144, %c0_145, %c0_146] : memref<4x1x128xf32, #tpu.memory_space<vmem>>, vector<1x1x128xf32>
    %185 = vector.shape_cast %184 : vector<1x1x128xf32> to vector<1x128xf32>
    %cst_147 = arith.constant dense<0.000000e+00> : vector<128xf32>
    %186 = vector.multi_reduction <add>, %181, %cst_147 [0] : vector<2x128xf32> to vector<128xf32>
    %187 = vector.shape_cast %186 : vector<128xf32> to vector<1x128xf32>
    %188 = arith.addf %185, %187 : vector<1x128xf32>
    %c3_148 = arith.constant 3 : index
    %c0_149 = arith.constant 0 : index
    %c0_150 = arith.constant 0 : index
    %189 = vector.load %arg6[%c3_148, %c0_149, %c0_150] : memref<4x1x128xf32, #tpu.memory_space<vmem>>, vector<1x1x128xf32>
    %190 = vector.shape_cast %189 : vector<1x1x128xf32> to vector<1x128xf32>
    %191 = vector.shape_cast %188 : vector<1x128xf32> to vector<1x1x128xf32>
    tpu.vector_store %arg6[%c3_148, %c0_149, %c0_150], %191 {strides = array<i32>} : memref<4x1x128xf32, #tpu.memory_space<vmem>>, vector<1x1x128xf32>,
    %c3_151 = arith.constant 3 : index
    %c0_152 = arith.constant 0 : index
    %c0_153 = arith.constant 0 : index
    %192 = vector.load %arg7[%c3_151, %c0_152, %c0_153] : memref<4x1x128xf32, #tpu.memory_space<vmem>>, vector<1x1x128xf32>
    %193 = vector.shape_cast %192 : vector<1x1x128xf32> to vector<1x128xf32>
    %cst_154 = arith.constant dense<0.000000e+00> : vector<128xf32>
    %194 = vector.multi_reduction <add>, %183, %cst_154 [0] : vector<2x128xf32> to vector<128xf32>
    %195 = vector.shape_cast %194 : vector<128xf32> to vector<1x128xf32>
    %196 = arith.addf %193, %195 : vector<1x128xf32>
    %c3_155 = arith.constant 3 : index
    %c0_156 = arith.constant 0 : index
    %c0_157 = arith.constant 0 : index
    %197 = vector.load %arg7[%c3_155, %c0_156, %c0_157] : memref<4x1x128xf32, #tpu.memory_space<vmem>>, vector<1x1x128xf32>
    %198 = vector.shape_cast %197 : vector<1x1x128xf32> to vector<1x128xf32>
    %199 = vector.shape_cast %196 : vector<1x128xf32> to vector<1x1x128xf32>
    tpu.vector_store %arg7[%c3_155, %c0_156, %c0_157], %199 {strides = array<i32>} : memref<4x1x128xf32, #tpu.memory_space<vmem>>, vector<1x1x128xf32>,
    %c3_158 = arith.constant 3 : index
    %c0_159 = arith.constant 0 : index
    %c0_160 = arith.constant 0 : index
    %200 = vector.load %arg8[%c3_158, %c0_159, %c0_160] : memref<4x1x128xf32, #tpu.memory_space<vmem>>, vector<1x1x128xf32>
    %201 = vector.shape_cast %200 : vector<1x1x128xf32> to vector<1x128xf32>
    %202 = arith.mulf %9, %181 : vector<2x128xf32>
    %cst_161 = arith.constant dense<0.000000e+00> : vector<128xf32>
    %203 = vector.multi_reduction <add>, %202, %cst_161 [0] : vector<2x128xf32> to vector<128xf32>
    %204 = vector.shape_cast %203 : vector<128xf32> to vector<1x128xf32>
    %205 = arith.addf %201, %204 : vector<1x128xf32>
    %c3_162 = arith.constant 3 : index
    %c0_163 = arith.constant 0 : index
    %c0_164 = arith.constant 0 : index
    %206 = vector.load %arg8[%c3_162, %c0_163, %c0_164] : memref<4x1x128xf32, #tpu.memory_space<vmem>>, vector<1x1x128xf32>
    %207 = vector.shape_cast %206 : vector<1x1x128xf32> to vector<1x128xf32>
    %208 = vector.shape_cast %205 : vector<1x128xf32> to vector<1x1x128xf32>
    tpu.vector_store %arg8[%c3_162, %c0_163, %c0_164], %208 {strides = array<i32>} : memref<4x1x128xf32, #tpu.memory_space<vmem>>, vector<1x1x128xf32>,
    %c3_165 = arith.constant 3 : index
    %c0_166 = arith.constant 0 : index
    %c0_167 = arith.constant 0 : index
    %209 = vector.load %arg9[%c3_165, %c0_166, %c0_167] : memref<4x1x128xf32, #tpu.memory_space<vmem>>, vector<1x1x128xf32>
    %210 = vector.shape_cast %209 : vector<1x1x128xf32> to vector<1x128xf32>
    %211 = arith.mulf %9, %183 : vector<2x128xf32>
    %cst_168 = arith.constant dense<0.000000e+00> : vector<128xf32>
    %212 = vector.multi_reduction <add>, %211, %cst_168 [0] : vector<2x128xf32> to vector<128xf32>
    %213 = vector.shape_cast %212 : vector<128xf32> to vector<1x128xf32>
    %214 = arith.addf %210, %213 : vector<1x128xf32>
    %c3_169 = arith.constant 3 : index
    %c0_170 = arith.constant 0 : index
    %c0_171 = arith.constant 0 : index
    %215 = vector.load %arg9[%c3_169, %c0_170, %c0_171] : memref<4x1x128xf32, #tpu.memory_space<vmem>>, vector<1x1x128xf32>
    %216 = vector.shape_cast %215 : vector<1x1x128xf32> to vector<1x128xf32>
    %217 = vector.shape_cast %214 : vector<1x128xf32> to vector<1x1x128xf32>
    tpu.vector_store %arg9[%c3_169, %c0_170, %c0_171], %217 {strides = array<i32>} : memref<4x1x128xf32, #tpu.memory_space<vmem>>, vector<1x1x128xf32>,
    %c0_i32_172 = arith.constant 0 : i32
    %218 = arith.cmpi eq, %arg2, %c0_i32_172 : i32
    %219 = arith.extui %218 : i1 to i32
    %c0_i32_173 = arith.constant 0 : i32
    %220 = arith.cmpi ne, %219, %c0_i32_173 : i32
    scf.if %220 {
      %c0_174 = arith.constant 0 : index
      %c0_175 = arith.constant 0 : index
      %c0_176 = arith.constant 0 : index
      %221 = vector.load %arg6[%c0_174, %c0_175, %c0_176] : memref<4x1x128xf32, #tpu.memory_space<vmem>>, vector<4x1x128xf32>
      %cst_177 = arith.constant dense<0.000000e+00> : vector<4x1xf32>
      %222 = vector.multi_reduction <add>, %221, %cst_177 [2] : vector<4x1x128xf32> to vector<4x1xf32>
      %cst_178 = arith.constant dense<0.000000e+00> : vector<4xf32>
      %223 = vector.multi_reduction <add>, %222, %cst_178 [1] : vector<4x1xf32> to vector<4xf32>
      %c0_179 = arith.constant 0 : index
      %c0_180 = arith.constant 0 : index
      %c0_181 = arith.constant 0 : index
      %c0_182 = arith.constant 0 : index
      %224 = vector.load %arg5[%c0_179, %c0_180, %c0_181, %c0_182] : memref<1x1x4x4xf32, #tpu.memory_space<vmem>>, vector<1x1x1x4xf32>
      %225 = vector.shape_cast %224 : vector<1x1x1x4xf32> to vector<4xf32>
      %226 = vector.shape_cast %223 : vector<4xf32> to vector<1x1x1x4xf32>
      tpu.vector_store %arg5[%c0_179, %c0_180, %c0_181, %c0_182], %226 {strides = array<i32>} : memref<1x1x4x4xf32, #tpu.memory_space<vmem>>, vector<1x1x1x4xf32>,
      %c0_183 = arith.constant 0 : index
      %c0_184 = arith.constant 0 : index
      %c0_185 = arith.constant 0 : index
      %227 = vector.load %arg7[%c0_183, %c0_184, %c0_185] : memref<4x1x128xf32, #tpu.memory_space<vmem>>, vector<4x1x128xf32>
      %cst_186 = arith.constant dense<0.000000e+00> : vector<4x1xf32>
      %228 = vector.multi_reduction <add>, %227, %cst_186 [2] : vector<4x1x128xf32> to vector<4x1xf32>
      %cst_187 = arith.constant dense<0.000000e+00> : vector<4xf32>
      %229 = vector.multi_reduction <add>, %228, %cst_187 [1] : vector<4x1xf32> to vector<4xf32>
      %c0_188 = arith.constant 0 : index
      %c0_189 = arith.constant 0 : index
      %c1_190 = arith.constant 1 : index
      %c0_191 = arith.constant 0 : index
      %230 = vector.load %arg5[%c0_188, %c0_189, %c1_190, %c0_191] : memref<1x1x4x4xf32, #tpu.memory_space<vmem>>, vector<1x1x1x4xf32>
      %231 = vector.shape_cast %230 : vector<1x1x1x4xf32> to vector<4xf32>
      %232 = vector.shape_cast %229 : vector<4xf32> to vector<1x1x1x4xf32>
      tpu.vector_store %arg5[%c0_188, %c0_189, %c1_190, %c0_191], %232 {strides = array<i32>} : memref<1x1x4x4xf32, #tpu.memory_space<vmem>>, vector<1x1x1x4xf32>,
      %c0_192 = arith.constant 0 : index
      %c0_193 = arith.constant 0 : index
      %c0_194 = arith.constant 0 : index
      %233 = vector.load %arg8[%c0_192, %c0_193, %c0_194] : memref<4x1x128xf32, #tpu.memory_space<vmem>>, vector<4x1x128xf32>
      %cst_195 = arith.constant dense<0.000000e+00> : vector<4x1xf32>
      %234 = vector.multi_reduction <add>, %233, %cst_195 [2] : vector<4x1x128xf32> to vector<4x1xf32>
      %cst_196 = arith.constant dense<0.000000e+00> : vector<4xf32>
      %235 = vector.multi_reduction <add>, %234, %cst_196 [1] : vector<4x1xf32> to vector<4xf32>
      %c0_197 = arith.constant 0 : index
      %c0_198 = arith.constant 0 : index
      %c2_199 = arith.constant 2 : index
      %c0_200 = arith.constant 0 : index
      %236 = vector.load %arg5[%c0_197, %c0_198, %c2_199, %c0_200] : memref<1x1x4x4xf32, #tpu.memory_space<vmem>>, vector<1x1x1x4xf32>
      %237 = vector.shape_cast %236 : vector<1x1x1x4xf32> to vector<4xf32>
      %238 = vector.shape_cast %235 : vector<4xf32> to vector<1x1x1x4xf32>
      tpu.vector_store %arg5[%c0_197, %c0_198, %c2_199, %c0_200], %238 {strides = array<i32>} : memref<1x1x4x4xf32, #tpu.memory_space<vmem>>, vector<1x1x1x4xf32>,
      %c0_201 = arith.constant 0 : index
      %c0_202 = arith.constant 0 : index
      %c0_203 = arith.constant 0 : index
      %239 = vector.load %arg9[%c0_201, %c0_202, %c0_203] : memref<4x1x128xf32, #tpu.memory_space<vmem>>, vector<4x1x128xf32>
      %cst_204 = arith.constant dense<0.000000e+00> : vector<4x1xf32>
      %240 = vector.multi_reduction <add>, %239, %cst_204 [2] : vector<4x1x128xf32> to vector<4x1xf32>
      %cst_205 = arith.constant dense<0.000000e+00> : vector<4xf32>
      %241 = vector.multi_reduction <add>, %240, %cst_205 [1] : vector<4x1xf32> to vector<4xf32>
      %c0_206 = arith.constant 0 : index
      %c0_207 = arith.constant 0 : index
      %c3_208 = arith.constant 3 : index
      %c0_209 = arith.constant 0 : index
      %242 = vector.load %arg5[%c0_206, %c0_207, %c3_208, %c0_209] : memref<1x1x4x4xf32, #tpu.memory_space<vmem>>, vector<1x1x1x4xf32>
      %243 = vector.shape_cast %242 : vector<1x1x1x4xf32> to vector<4xf32>
      %244 = vector.shape_cast %241 : vector<4xf32> to vector<1x1x1x4xf32>
      tpu.vector_store %arg5[%c0_206, %c0_207, %c3_208, %c0_209], %244 {strides = array<i32>} : memref<1x1x4x4xf32, #tpu.memory_space<vmem>>, vector<1x1x1x4xf32>,
    } else {
    }
    return
  }
  func.func @transform_0(%arg0: i32, %arg1: i32, %arg2: i32) -> (i32, i32, i32, i32) {
    %c1_i32 = arith.constant 1 : i32
    %0 = arith.muli %arg1, %c1_i32 : i32
    %1 = arith.addi %0, %arg2 : i32
    %c0_i32 = arith.constant 0 : i32
    %2 = arith.minsi %1, %c0_i32 : i32
    %c0_i32_0 = arith.constant 0 : i32
    %c0_i32_1 = arith.constant 0 : i32
    %c0_i32_2 = arith.constant 0 : i32
    return %arg0, %c0_i32_0, %2, %c0_i32_1 : i32, i32, i32, i32
  }
  func.func @transform_1(%arg0: i32, %arg1: i32, %arg2: i32) -> (i32, i32, i32) {
    %c1_i32 = arith.constant 1 : i32
    %0 = arith.muli %arg1, %c1_i32 : i32
    %1 = arith.addi %0, %arg2 : i32
    %c0_i32 = arith.constant 0 : i32
    %2 = arith.minsi %1, %c0_i32 : i32
    %c0_i32_0 = arith.constant 0 : i32
    %c0_i32_1 = arith.constant 0 : i32
    return %arg0, %2, %c0_i32_0 : i32, i32, i32
  }
  func.func @transform_2(%arg0: i32, %arg1: i32, %arg2: i32) -> (i32, i32, i32, i32) {
    %c0_i32 = arith.constant 0 : i32
    %c0_i32_0 = arith.constant 0 : i32
    %c0_i32_1 = arith.constant 0 : i32
    return %arg0, %arg1, %c0_i32, %c0_i32_0 : i32, i32, i32, i32
  }
}

</mosaic_0001>

<llo_original>
// kernel: tpu_custom_call.1
$region0: #{tpu_custom_call.1}
  #allocation0 [shape = 'u32[]', space=smem, size = 0x4, offset = 0x4, fixed_abs, tag = 'smem constant byte address 0x4 - core index']
  #allocation1 [shape = 'u32[72,128]{1,0:T(1,128)}', space=vmem, size = 0x9000, scoped, tag = 'internal scratch']
  #allocation2 [shape = 'f32[4,1,128]{2,1,0:T(1,128)}', space=vmem, size = 0x800, scoped, tag = 'scratch operand']
  #allocation3 [shape = 'f32[4,1,128]{2,1,0:T(1,128)}', space=vmem, size = 0x800, scoped, tag = 'scratch operand']
  #allocation4 [shape = 'f32[4,1,128]{2,1,0:T(1,128)}', space=vmem, size = 0x800, scoped, tag = 'scratch operand']
  #allocation5 [shape = 'f32[4,1,128]{2,1,0:T(1,128)}', space=vmem, size = 0x800, scoped, tag = 'scratch operand']
  %s0 = inlined_call_operand.hbm [shape: f32[2,4,2,128], index: 0, kind: input, shape index: {}]
  %s1 = inlined_call_operand.hbm [shape: s32[2,2,128], index: 1, kind: input, shape index: {}]
  %s2 = inlined_call_operand.hbm [shape: f32[2,1,4,4], index: 2, kind: output, shape index: {}]
  %s3 = sld [smem:[#allocation0]]
  $region57: #{tpu_custom_call.1} parent=0
    _
  %s5 = ssub.s32 1, %s3
  %s6 = scalar_select 0, %s5, %s3
  $region1: #{tpu_custom_call.1} parent=0
    #allocation6 [shape = 'u8[8192]{0}', space=vmem, size = 0x2000, scoped, tag = 'input window, operand 0']
    #allocation7 [shape = 's32[2]{0}', space=sflag, size = 0x8, scoped, tag = 'scoped memory for tpu_custom_call.1']
    #allocation8 [shape = 's32[2]{0}', space=sflag, size = 0x8, scoped, tag = 'scoped memory for tpu_custom_call.1']
    #allocation9 [shape = 'u8[2048]{0}', space=vmem, size = 0x800, scoped, tag = 'input window, operand 1']
    #allocation10 [shape = 's32[2]{0}', space=sflag, size = 0x8, scoped, tag = 'scoped memory for tpu_custom_call.1']
    #allocation11 [shape = 'u8[4096]{0}', space=vmem, size = 0x1000, scoped, tag = 'output window, operand 0']
    %7 = vsyncpa [#allocation7], 0
    %s8 = scalar_lea.sflag [#allocation7], 1
    %9 = vsyncpa %s8, 0
    %10 = vsyncpa [#allocation10], 0
    %s11 = scalar_lea.sflag [#allocation10], 1
    %12 = vsyncpa %s11, 0
    %13 = vsyncpa [#allocation8], 0
    %s14 = scalar_lea.sflag [#allocation8], 1
    %15 = vsyncpa %s14, 0
    loop: start=0, step=1, limit=4
    $region2: #{tpu_custom_call.1} parent=1 // loop_pre_header
      _
    $region3: #{tpu_custom_call.1} parent=1 // loop_header
      %s17 = sphi 0, %s21
      %p18 = scmp.ge.s32.totalorder %s17, 4
      %s24 = sphi 0, %s43
      %s25 = sphi 0, %s39
      %s26 = sphi 0, %s35
      %s27 = sphi 0, %s24
      %s28 = sphi 0, %s25
      %s29 = sphi 0, %s26
      %s30 = sphi 0, %s27
      %s31 = sphi 0, %s28
      %s32 = sphi 0, %s29
      %s54 = sphi 0, %s56
      %s57 = sphi 0, %s54
      %s58 = sphi 0, %s57
      %s74 = sphi 0, %s58
      %s88 = sphi 0, %s90
      %s91 = sphi 0, %s88
      %s92 = sphi 0, %s91
      %s108 = sphi 0, %s92
      %s116 = sphi 0, %s118
      %s119 = sphi 0, %s116
      %s120 = sphi 0, %s119
      %s136 = sphi 0, %s120
    $region4: #{tpu_custom_call.1} parent=1 // loop_header_branch
      %20 = sbr.rel (%p18) target = $region8
    $region5: #{tpu_custom_call.1} parent=1 // loop_body
      %s22 = ssub.s32 %s17, 1
      %s23 = ssub.s32 %s17, 2
      %s33 = sadd.s32 1, %s26
      %p34 = scmp.ge.s32.totalorder %s33, 1
      %s35 = scalar_select %p34, 0, %s33
      %s36 = sadd.s32 1, %s25
      %s37 = scalar_select %p34, %s36, %s25
      %p38 = scmp.ge.s32.totalorder %s37, 1
      %s39 = scalar_select %p38, 0, %s37
      %s40 = sadd.s32 1, %s24
      %s41 = scalar_select %p38, %s40, %s24
      %p42 = scmp.ge.s32.totalorder %s41, 2
      %s43 = scalar_select %p42, 0, %s41
      %s44 = sadd.s32 %s25, %s26
      %p45 = scmp.lt.s32.totalorder %s44, 0
      %s46 = scalar_select %p45, %s44, 0
      %s47 = sadd.s32 %s39, %s35
      %p48 = scmp.lt.s32.totalorder %s47, 0
      %s49 = scalar_select %p48, %s47, 0
      %s50 = ssub.s32 %s24, %s43
      %s51 = ssub.s32 %s46, %s49
      %s52 = sor.u32 %s50, %s51
      %p53 = scmp.eq.s32.totalorder %s52, 0
      %s55 = sadd.s32 %s54, 1
      %s56 = scalar_select %p53, %s54, %s55
      %p59 = pneg %p53
      %p60 = scmp.eq.s32.totalorder %s17, 1
      %p61 = por %p59, %p60
      %p62 = scmp.ne.s32.totalorder %s54, %s57
      %p63 = scmp.eq.s32.totalorder %s17, 0
      %p64 = por %p62, %p63
      %p65 = scmp.ne.s32.totalorder %s54, %s57
      %p66 = scmp.eq.s32.totalorder %s22, 1
      %p67 = por %p65, %p66
      %p68 = scmp.ne.s32.totalorder %s57, %s58
      %p69 = scmp.eq.s32.totalorder %s22, 0
      %p70 = por %p68, %p69
      %p71 = scmp.ne.s32.totalorder %s57, %s58
      %p72 = scmp.eq.s32.totalorder %s23, 1
      %p73 = por %p71, %p72
      %p75 = scmp.ne.s32.totalorder %s58, %s74
      %p76 = scmp.eq.s32.totalorder %s23, 0
      %p77 = por %p75, %p76
      %s78 = sadd.s32 %s25, %s26
      %p79 = scmp.lt.s32.totalorder %s78, 0
      %s80 = scalar_select %p79, %s78, 0
      %s81 = sadd.s32 %s39, %s35
      %p82 = scmp.lt.s32.totalorder %s81, 0
      %s83 = scalar_select %p82, %s81, 0
      %s84 = ssub.s32 %s24, %s43
      %s85 = ssub.s32 %s80, %s83
      %s86 = sor.u32 %s84, %s85
      %p87 = scmp.eq.s32.totalorder %s86, 0
      %s89 = sadd.s32 %s88, 1
      %s90 = scalar_select %p87, %s88, %s89
      %p93 = pneg %p87
      %p94 = scmp.eq.s32.totalorder %s17, 1
      %p95 = por %p93, %p94
      %p96 = scmp.ne.s32.totalorder %s88, %s91
      %p97 = scmp.eq.s32.totalorder %s17, 0
      %p98 = por %p96, %p97
      %p99 = scmp.ne.s32.totalorder %s88, %s91
      %p100 = scmp.eq.s32.totalorder %s22, 1
      %p101 = por %p99, %p100
      %p102 = scmp.ne.s32.totalorder %s91, %s92
      %p103 = scmp.eq.s32.totalorder %s22, 0
      %p104 = por %p102, %p103
      %p105 = scmp.ne.s32.totalorder %s91, %s92
      %p106 = scmp.eq.s32.totalorder %s23, 1
      %p107 = por %p105, %p106
      %p109 = scmp.ne.s32.totalorder %s92, %s108
      %p110 = scmp.eq.s32.totalorder %s23, 0
      %p111 = por %p109, %p110
      %s112 = ssub.s32 %s24, %s43
      %s113 = ssub.s32 %s25, %s39
      %s114 = sor.u32 %s112, %s113
      %p115 = scmp.eq.s32.totalorder %s114, 0
      %s117 = sadd.s32 %s116, 1
      %s118 = scalar_select %p115, %s116, %s117
      %p121 = pneg %p115
      %p122 = scmp.eq.s32.totalorder %s17, 1
      %p123 = por %p121, %p122
      %p124 = scmp.ne.s32.totalorder %s116, %s119
      %p125 = scmp.eq.s32.totalorder %s17, 0
      %p126 = por %p124, %p125
      %p127 = scmp.ne.s32.totalorder %s116, %s119
      %p128 = scmp.eq.s32.totalorder %s22, 1
      %p129 = por %p127, %p128
      %p130 = scmp.ne.s32.totalorder %s119, %s120
      %p131 = scmp.eq.s32.totalorder %s22, 0
      %p132 = por %p130, %p131
      %p133 = scmp.ne.s32.totalorder %s119, %s120
      %p134 = scmp.eq.s32.totalorder %s23, 1
      %p135 = por %p133, %p134
      %p137 = scmp.ne.s32.totalorder %s120, %s136
      %p138 = scmp.eq.s32.totalorder %s23, 0
      %p139 = por %p137, %p138
      %p140 = scmp.le.s32.totalorder 1, %s17
      %p141 = scmp.lt.s32.totalorder %s17, 3
      %p142 = pnand %p140, %p141
      %p143 = pneg %p142
      // Predicated region
      $region9: #{tpu_custom_call.1} parent=5 // pred_check
        _
      $region10: #{tpu_custom_call.1} parent=5 // pred_check_branch
        %145 = sbr.rel (%p142) target = $region12
      $region11: #{tpu_custom_call.1} parent=5 // pred_region
        %s146 = ssub.s32 %s17, 1
      $region12: #{tpu_custom_call.1} parent=5 // pred_fallthru
        _
      %p147 = scmp.lt.s32.totalorder %s17, 2
      // Predicated region
      $region13: #{tpu_custom_call.1} parent=5 // pred_check
        %p148 = pneg %p147
      $region14: #{tpu_custom_call.1} parent=5 // pred_check_branch
        %150 = sbr.rel (%p148) target = $region16
      $region15: #{tpu_custom_call.1} parent=5 // pred_region
        // Predicated region
        $region17: #{tpu_custom_call.1} parent=15 // pred_check
          %p151 = pneg %p64
        $region18: #{tpu_custom_call.1} parent=15 // pred_check_branch
          %153 = sbr.rel (%p151) target = $region20
        $region19: #{tpu_custom_call.1} parent=15 // pred_region
          %s154 = sand.u32 %s54, 1
          %s155 = scalar_lea.sflag [#allocation7], %s154
          %s156 = sand.u32 %s54, 1
          %s157 = smul.addr %s156, 8
          %s158 = scalar_lea.vmem [#allocation6], %s157
          %s159 = sadd.s32 %s25, %s26
          %p160 = scmp.lt.s32.totalorder %s159, 0
          %s161 = scalar_select %p160, %s159, 0
          %163 = vsyncadd %s155, 0
          %s164 = smul.addr %s24, 4
          %s165 = sadd.s32 %s161, %s164
          %s166 = smul.addr %s165, 2
          %s167 = scalar_lea.hbm %s0, %s166
          %s168 = sshll.u32 %s167, 4
          %s169 = int_to_ptr.hbm [resolvable:$true] %s168
          %s170 = sshll.u32 %s158, 4
          %s171 = int_to_ptr.vmem [resolvable:$true] %s170
          %176 = dma.hbm_to_vmem [thread:$0]  %s169, 128, %s171, %s155, 32, 32, 2
        $region20: #{tpu_custom_call.1} parent=15 // pred_fallthru
          _
        // Predicated region
        $region21: #{tpu_custom_call.1} parent=15 // pred_check
          %p177 = pneg %p98
        $region22: #{tpu_custom_call.1} parent=15 // pred_check_branch
          %179 = sbr.rel (%p177) target = $region24
        $region23: #{tpu_custom_call.1} parent=15 // pred_region
          %s180 = sand.u32 %s88, 1
          %s181 = scalar_lea.sflag [#allocation10], %s180
          %s182 = sand.u32 %s88, 1
          %s183 = smul.addr %s182, 2
          %s184 = scalar_lea.vmem [#allocation9], %s183
          %s185 = sadd.s32 %s25, %s26
          %p186 = scmp.lt.s32.totalorder %s185, 0
          %s187 = scalar_select %p186, %s185, 0
          %189 = vsyncadd %s181, 0
          %s190 = sadd.s32 %s187, %s24
          %s191 = smul.addr %s190, 2
          %s192 = scalar_lea.hbm %s1, %s191
          %s194 = sshll.u32 %s192, 4
          %s195 = int_to_ptr.hbm [resolvable:$true] %s194
          %s196 = sshll.u32 %s184, 4
          %s197 = int_to_ptr.vmem [resolvable:$true] %s196
          %199 = dma.hbm_to_vmem [thread:$0]  %s195, 32, %s197, %s181
        $region24: #{tpu_custom_call.1} parent=15 // pred_fallthru
          _
      $region16: #{tpu_custom_call.1} parent=5 // pred_fallthru
        _
      %p200 = scmp.le.s32.totalorder 1, %s17
      %p201 = scmp.lt.s32.totalorder %s17, 3
      %p202 = pnand %p200, %p201
      %p203 = pneg %p202
      // Predicated region
      $region25: #{tpu_custom_call.1} parent=5 // pred_check
        _
      $region26: #{tpu_custom_call.1} parent=5 // pred_check_branch
        %205 = sbr.rel (%p202) target = $region28
      $region27: #{tpu_custom_call.1} parent=5 // pred_region
        %s206 = ssub.s32 %s17, 1
        %s207 = sand.u32 %s57, 1
        %s208 = scalar_lea.sflag [#allocation7], %s207
        %s209 = sand.u32 %s57, 1
        %s210 = smul.addr %s209, 8
        %s211 = scalar_lea.vmem [#allocation6], %s210
        // Predicated region
        $region29: #{tpu_custom_call.1} parent=27 // pred_check
          %p212 = pneg %p70
        $region30: #{tpu_custom_call.1} parent=27 // pred_check_branch
          %214 = sbr.rel (%p212) target = $region32
        $region31: #{tpu_custom_call.1} parent=27 // pred_region
          %216 = dma.done %s208, 128
        $region32: #{tpu_custom_call.1} parent=27 // pred_fallthru
          _
        %s217 = sand.u32 %s91, 1
        %s218 = scalar_lea.sflag [#allocation10], %s217
        %s219 = sand.u32 %s91, 1
        %s220 = smul.addr %s219, 2
        %s221 = scalar_lea.vmem [#allocation9], %s220
        // Predicated region
        $region33: #{tpu_custom_call.1} parent=27 // pred_check
          %p222 = pneg %p104
        $region34: #{tpu_custom_call.1} parent=27 // pred_check_branch
          %224 = sbr.rel (%p222) target = $region36
        $region35: #{tpu_custom_call.1} parent=27 // pred_region
          %226 = dma.done %s218, 32
        $region36: #{tpu_custom_call.1} parent=27 // pred_fallthru
          _
        %s227 = sand.u32 %s57, 1
        %s228 = scalar_lea.sflag [#allocation7], %s227
        %s229 = sand.u32 %s57, 1
        %s230 = smul.addr %s229, 8
        %s231 = scalar_lea.vmem [#allocation6], %s230
        %p232 = pneg %p70
        %p233 = pneg %p67
        %s234 = sand.u32 %s91, 1
        %s235 = scalar_lea.sflag [#allocation10], %s234
        %s236 = sand.u32 %s91, 1
        %s237 = smul.addr %s236, 2
        %s238 = scalar_lea.vmem [#allocation9], %s237
        %p239 = pneg %p104
        %p240 = pneg %p101
        %p241 = pneg %p132
        %p242 = pneg %p129
        %s243 = sand.u32 %s119, 1
        %s244 = scalar_lea.sflag [#allocation8], %s243
        %s245 = sand.u32 %s119, 1
        %s246 = smul.addr %s245, 4
        %s247 = scalar_lea.vmem [#allocation11], %s246
        %s248 = sadd.s32 %s28, %s29
        %p249 = scmp.lt.s32.totalorder %s248, 0
        %s250 = scalar_select %p249, %s248, 0
        %s251 = sadd.s32 %s28, %s29
        %p252 = scmp.lt.s32.totalorder %s251, 0
        %s253 = scalar_select %p252, %s251, 0
        %p254 = scmp.eq.s32.totalorder %s29, 0
        // Predicated region
        $region37: #{tpu_custom_call.1} parent=27 // pred_check
          %p255 = pneg %p254
        $region38: #{tpu_custom_call.1} parent=27 // pred_check_branch
          %257 = sbr.rel (%p255) target = $region40
        $region39: #{tpu_custom_call.1} parent=27 // pred_region
          %258 = vst [vmem:[#allocation2] sm:$0x1] 0.0
          %259 = vst [vmem:[#allocation2 + $0x1] sm:$0x1] 0.0
          %260 = vst [vmem:[#allocation2 + $0x2] sm:$0x1] 0.0
          %261 = vst [vmem:[#allocation2 + $0x3] sm:$0x1] 0.0
          %262 = vst [vmem:[#allocation3] sm:$0x1] 0.0
          %263 = vst [vmem:[#allocation3 + $0x1] sm:$0x1] 0.0
          %264 = vst [vmem:[#allocation3 + $0x2] sm:$0x1] 0.0
          %265 = vst [vmem:[#allocation3 + $0x3] sm:$0x1] 0.0
          %266 = vst [vmem:[#allocation4] sm:$0x1] 0.0
          %267 = vst [vmem:[#allocation4 + $0x1] sm:$0x1] 0.0
          %268 = vst [vmem:[#allocation4 + $0x2] sm:$0x1] 0.0
          %269 = vst [vmem:[#allocation4 + $0x3] sm:$0x1] 0.0
          %270 = vst [vmem:[#allocation5] sm:$0x1] 0.0
          %271 = vst [vmem:[#allocation5 + $0x1] sm:$0x1] 0.0
          %272 = vst [vmem:[#allocation5 + $0x2] sm:$0x1] 0.0
          %273 = vst [vmem:[#allocation5 + $0x3] sm:$0x1] 0.0
        $region40: #{tpu_custom_call.1} parent=27 // pred_fallthru
          _
        %v274 = vld [vmem:[%s221] sm:$0x3]
        %v275 = vand.u32 %v274, 65535
        %v276 = vshra.s32 %v274, 16
        %v277 = vcvt.s32.f32 %v276
        %v278 = vld [vmem:[%s211] sm:$0x3]
        %s279 = scalar_lea.vmem %s211, 2 [#allocation6]
        %v280 = vld [vmem:[%s279] sm:$0x3]
        %v281 = vmax.f32 %v278, %v280
        %s282 = scalar_lea.vmem %s211, 4 [#allocation6]
        %v283 = vld [vmem:[%s282] sm:$0x3]
        %v284 = vmax.f32 %v281, %v283
        %s285 = scalar_lea.vmem %s211, 6 [#allocation6]
        %v286 = vld [vmem:[%s285] sm:$0x3]
        %v287 = vmax.f32 %v284, %v286
        %v288 = vsub.f32 %v278, %v287
        %v289 = vmul.f32 %v288, 1.442695
        %v290 = vpow.pop %v289
        %v291 = vsub.f32 %v280, %v287
        %v292 = vmul.f32 %v291, 1.442695
        %v293 = vpow.pop %v292
        %v294 = vadd.f32 %v290, %v293
        %v295 = vsub.f32 %v283, %v287
        %v296 = vmul.f32 %v295, 1.442695
        %v297 = vpow.pop %v296
        %v298 = vadd.f32 %v294, %v297
        %v299 = vsub.f32 %v286, %v287
        %v300 = vmul.f32 %v299, 1.442695
        %v301 = vpow.pop %v300
        %v302 = vadd.f32 %v298, %v301
        %v303 = vlog2.pop %v302
        %v304 = vmul.f32 %v303, 0.6931472
        %v305 = vadd.f32 %v287, %v304
        %v306 = vsub.f32 %v278, %v305
        %vm307 = vcmp.eq.s32.totalorder %v275, 0
        %v308 = vsel %vm307, 1.0, 0.0
        %v309 = vsel %vm307, %v306, 0.0
        %v310 = vld [vmem:[#allocation2] sm:$0x1]
        %vm311 = vcmask 1041408
        %v312 = vsel %vm311, %v308, 0.0
        %v313 = vrot.slane %v312, 4
        %v314 = vadd.f32 %v312, %v313
        %v315 = vrot.slane %v314, 2
        %v316 = vadd.f32 %v314, %v315
        %v317 = vrot.slane %v316, 1
        %v318 = vadd.f32 %v316, %v317
        %v319 = vadd.f32 %v310, %v318
        %320 = vst [vmem:[#allocation2] sm:$0x1] %v319
        %v321 = vld [vmem:[#allocation3] sm:$0x1]
        %v322 = vsel %vm311, %v309, 0.0
        %v323 = vrot.slane %v322, 4
        %v324 = vadd.f32 %v322, %v323
        %v325 = vrot.slane %v324, 2
        %v326 = vadd.f32 %v324, %v325
        %v327 = vrot.slane %v326, 1
        %v328 = vadd.f32 %v326, %v327
        %v329 = vadd.f32 %v321, %v328
        %330 = vst [vmem:[#allocation3] sm:$0x1] %v329
        %v331 = vld [vmem:[#allocation4] sm:$0x1]
        %v332 = vmul.f32 %v277, %v308
        %v333 = vsel %vm311, %v332, 0.0
        %v334 = vrot.slane %v333, 4
        %v335 = vadd.f32 %v333, %v334
        %v336 = vrot.slane %v335, 2
        %v337 = vadd.f32 %v335, %v336
        %v338 = vrot.slane %v337, 1
        %v339 = vadd.f32 %v337, %v338
        %v340 = vadd.f32 %v331, %v339
        %341 = vst [vmem:[#allocation4] sm:$0x1] %v340
        %v342 = vld [vmem:[#allocation5] sm:$0x1]
        %v343 = vmul.f32 %v277, %v309
        %v344 = vsel %vm311, %v343, 0.0
        %v345 = vrot.slane %v344, 4
        %v346 = vadd.f32 %v344, %v345
        %v347 = vrot.slane %v346, 2
        %v348 = vadd.f32 %v346, %v347
        %v349 = vrot.slane %v348, 1
        %v350 = vadd.f32 %v348, %v349
        %v351 = vadd.f32 %v342, %v350
        %352 = vst [vmem:[#allocation5] sm:$0x1] %v351
        %v353 = vld [vmem:[%s279] sm:$0x3]
        %v354 = vsub.f32 %v353, %v305
        %vm355 = vcmp.eq.s32.totalorder %v275, 1
        %v356 = vsel %vm355, 1.0, 0.0
        %v357 = vsel %vm355, %v354, 0.0
        %s358 = scalar_lea.vmem [#allocation2], 1
        %v359 = vld [vmem:[%s358] sm:$0x1]
        %v360 = vsel %vm311, %v356, 0.0
        %v361 = vrot.slane %v360, 4
        %v362 = vadd.f32 %v360, %v361
        %v363 = vrot.slane %v362, 2
        %v364 = vadd.f32 %v362, %v363
        %v365 = vrot.slane %v364, 1
        %v366 = vadd.f32 %v364, %v365
        %v367 = vadd.f32 %v359, %v366
        %368 = vst [vmem:[%s358] sm:$0x1] %v367
        %s369 = scalar_lea.vmem [#allocation3], 1
        %v370 = vld [vmem:[%s369] sm:$0x1]
        %v371 = vsel %vm311, %v357, 0.0
        %v372 = vrot.slane %v371, 4
        %v373 = vadd.f32 %v371, %v372
        %v374 = vrot.slane %v373, 2
        %v375 = vadd.f32 %v373, %v374
        %v376 = vrot.slane %v375, 1
        %v377 = vadd.f32 %v375, %v376
        %v378 = vadd.f32 %v370, %v377
        %379 = vst [vmem:[%s369] sm:$0x1] %v378
        %s380 = scalar_lea.vmem [#allocation4], 1
        %v381 = vld [vmem:[%s380] sm:$0x1]
        %v382 = vmul.f32 %v277, %v356
        %v383 = vsel %vm311, %v382, 0.0
        %v384 = vrot.slane %v383, 4
        %v385 = vadd.f32 %v383, %v384
        %v386 = vrot.slane %v385, 2
        %v387 = vadd.f32 %v385, %v386
        %v388 = vrot.slane %v387, 1
        %v389 = vadd.f32 %v387, %v388
        %v390 = vadd.f32 %v381, %v389
        %391 = vst [vmem:[%s380] sm:$0x1] %v390
        %s392 = scalar_lea.vmem [#allocation5], 1
        %v393 = vld [vmem:[%s392] sm:$0x1]
        %v394 = vmul.f32 %v277, %v357
        %v395 = vsel %vm311, %v394, 0.0
        %v396 = vrot.slane %v395, 4
        %v397 = vadd.f32 %v395, %v396
        %v398 = vrot.slane %v397, 2
        %v399 = vadd.f32 %v397, %v398
        %v400 = vrot.slane %v399, 1
        %v401 = vadd.f32 %v399, %v400
        %v402 = vadd.f32 %v393, %v401
        %403 = vst [vmem:[%s392] sm:$0x1] %v402
        %v404 = vld [vmem:[%s282] sm:$0x3]
        %v405 = vsub.f32 %v404, %v305
        %vm406 = vcmp.eq.s32.totalorder %v275, 2
        %v407 = vsel %vm406, 1.0, 0.0
        %v408 = vsel %vm406, %v405, 0.0
        %s409 = scalar_lea.vmem [#allocation2], 2
        %v410 = vld [vmem:[%s409] sm:$0x1]
        %v411 = vsel %vm311, %v407, 0.0
        %v412 = vrot.slane %v411, 4
        %v413 = vadd.f32 %v411, %v412
        %v414 = vrot.slane %v413, 2
        %v415 = vadd.f32 %v413, %v414
        %v416 = vrot.slane %v415, 1
        %v417 = vadd.f32 %v415, %v416
        %v418 = vadd.f32 %v410, %v417
        %419 = vst [vmem:[%s409] sm:$0x1] %v418
        %s420 = scalar_lea.vmem [#allocation3], 2
        %v421 = vld [vmem:[%s420] sm:$0x1]
        %v422 = vsel %vm311, %v408, 0.0
        %v423 = vrot.slane %v422, 4
        %v424 = vadd.f32 %v422, %v423
        %v425 = vrot.slane %v424, 2
        %v426 = vadd.f32 %v424, %v425
        %v427 = vrot.slane %v426, 1
        %v428 = vadd.f32 %v426, %v427
        %v429 = vadd.f32 %v421, %v428
        %430 = vst [vmem:[%s420] sm:$0x1] %v429
        %s431 = scalar_lea.vmem [#allocation4], 2
        %v432 = vld [vmem:[%s431] sm:$0x1]
        %v433 = vmul.f32 %v277, %v407
        %v434 = vsel %vm311, %v433, 0.0
        %v435 = vrot.slane %v434, 4
        %v436 = vadd.f32 %v434, %v435
        %v437 = vrot.slane %v436, 2
        %v438 = vadd.f32 %v436, %v437
        %v439 = vrot.slane %v438, 1
        %v440 = vadd.f32 %v438, %v439
        %v441 = vadd.f32 %v432, %v440
        %442 = vst [vmem:[%s431] sm:$0x1] %v441
        %s443 = scalar_lea.vmem [#allocation5], 2
        %v444 = vld [vmem:[%s443] sm:$0x1]
        %v445 = vmul.f32 %v277, %v408
        %v446 = vsel %vm311, %v445, 0.0
        %v447 = vrot.slane %v446, 4
        %v448 = vadd.f32 %v446, %v447
        %v449 = vrot.slane %v448, 2
        %v450 = vadd.f32 %v448, %v449
        %v451 = vrot.slane %v450, 1
        %v452 = vadd.f32 %v450, %v451
        %v453 = vadd.f32 %v444, %v452
        %454 = vst [vmem:[%s443] sm:$0x1] %v453
        %v455 = vld [vmem:[%s285] sm:$0x3]
        %v456 = vsub.f32 %v455, %v305
        %vm457 = vcmp.eq.s32.totalorder %v275, 3
        %v458 = vsel %vm457, 1.0, 0.0
        %v459 = vsel %vm457, %v456, 0.0
        %s460 = scalar_lea.vmem [#allocation2], 3
        %v461 = vld [vmem:[%s460] sm:$0x1]
        %v462 = vsel %vm311, %v458, 0.0
        %v463 = vrot.slane %v462, 4
        %v464 = vadd.f32 %v462, %v463
        %v465 = vrot.slane %v464, 2
        %v466 = vadd.f32 %v464, %v465
        %v467 = vrot.slane %v466, 1
        %v468 = vadd.f32 %v466, %v467
        %v469 = vadd.f32 %v461, %v468
        %470 = vst [vmem:[%s460] sm:$0x1] %v469
        %s471 = scalar_lea.vmem [#allocation3], 3
        %v472 = vld [vmem:[%s471] sm:$0x1]
        %v473 = vsel %vm311, %v459, 0.0
        %v474 = vrot.slane %v473, 4
        %v475 = vadd.f32 %v473, %v474
        %v476 = vrot.slane %v475, 2
        %v477 = vadd.f32 %v475, %v476
        %v478 = vrot.slane %v477, 1
        %v479 = vadd.f32 %v477, %v478
        %v480 = vadd.f32 %v472, %v479
        %481 = vst [vmem:[%s471] sm:$0x1] %v480
        %s482 = scalar_lea.vmem [#allocation4], 3
        %v483 = vld [vmem:[%s482] sm:$0x1]
        %v484 = vmul.f32 %v277, %v458
        %v485 = vsel %vm311, %v484, 0.0
        %v486 = vrot.slane %v485, 4
        %v487 = vadd.f32 %v485, %v486
        %v488 = vrot.slane %v487, 2
        %v489 = vadd.f32 %v487, %v488
        %v490 = vrot.slane %v489, 1
        %v491 = vadd.f32 %v489, %v490
        %v492 = vadd.f32 %v483, %v491
        %493 = vst [vmem:[%s482] sm:$0x1] %v492
        %s494 = scalar_lea.vmem [#allocation5], 3
        %v495 = vld [vmem:[%s494] sm:$0x1]
        %v496 = vmul.f32 %v277, %v459
        %v497 = vsel %vm311, %v496, 0.0
        %v498 = vrot.slane %v497, 4
        %v499 = vadd.f32 %v497, %v498
        %v500 = vrot.slane %v499, 2
        %v501 = vadd.f32 %v499, %v500
        %v502 = vrot.slane %v501, 1
        %v503 = vadd.f32 %v501, %v502
        %v504 = vadd.f32 %v495, %v503
        %505 = vst [vmem:[%s494] sm:$0x1] %v504
        // Predicated region
        $region41: #{tpu_custom_call.1} parent=27 // pred_check
          %p506 = pneg %p254
        $region42: #{tpu_custom_call.1} parent=27 // pred_check_branch
          %508 = sbr.rel (%p506) target = $region44
        $region43: #{tpu_custom_call.1} parent=27 // pred_region
          %v509 = vld [vmem:[#allocation2] sm:$0x1]
          %v510 = vld [vmem:[#allocation2 + $0x1] sm:$0x1]
          %v511 = vld [vmem:[#allocation2 + $0x2] sm:$0x1]
          %v512 = vld [vmem:[#allocation2 + $0x3] sm:$0x1]
          %vm513 = vcmask 1040384
          %v514 = vsel %vm513, %v509, 0.0
          %515 = vadd.xlane.f32.xlu0 %v514
          %v516 = vpop.xlane.xlu0 %515
          %v517 = vsel %vm513, %v510, 0.0
          %518 = vadd.xlane.f32.xlu0 %v517
          %v519 = vpop.xlane.xlu0 %518
          %v520 = vsel %vm513, %v511, 0.0
          %521 = vadd.xlane.f32.xlu0 %v520
          %v522 = vpop.xlane.xlu0 %521
          %v523 = vsel %vm513, %v512, 0.0
          %524 = vadd.xlane.f32.xlu0 %v523
          %v525 = vpop.xlane.xlu0 %524
          %v526 = vadd.f32 %v516, 0.0
          %v527 = vadd.f32 %v519, 0.0
          %v528 = vadd.f32 %v522, 0.0
          %v529 = vadd.f32 %v525, 0.0
          %v534 = vrot.slane %v527, 7
          %vm535 = vcmask 1041409
          %v536 = vsel %vm535, %v534, %v526
          %v537 = vrot.slane %v528, 6
          %vm538 = vcmask 1042434
          %v539 = vsel %vm538, %v537, %v536
          %v540 = vrot.slane %v529, 5
          %vm541 = vcmask 1043459
          %v542 = vsel %vm541, %v540, %v539
          %v543 = vlaneseq
          %v544 = vand.u32 %v543, 127
          %v545 = vperm.slane %v542, %v544
          %vm547 = vcmask 24576
          %548 = vst.msk [vmem:[%s247] sm:$0x1] %vm547, %v545
          %v549 = vld [vmem:[#allocation3] sm:$0x1]
          %v550 = vld [vmem:[#allocation3 + $0x1] sm:$0x1]
          %v551 = vld [vmem:[#allocation3 + $0x2] sm:$0x1]
          %v552 = vld [vmem:[#allocation3 + $0x3] sm:$0x1]
          %v553 = vsel %vm513, %v549, 0.0
          %554 = vadd.xlane.f32.xlu0 %v553
          %v555 = vpop.xlane.xlu0 %554
          %v556 = vsel %vm513, %v550, 0.0
          %557 = vadd.xlane.f32.xlu0 %v556
          %v558 = vpop.xlane.xlu0 %557
          %v559 = vsel %vm513, %v551, 0.0
          %560 = vadd.xlane.f32.xlu0 %v559
          %v561 = vpop.xlane.xlu0 %560
          %v562 = vsel %vm513, %v552, 0.0
          %563 = vadd.xlane.f32.xlu0 %v562
          %v564 = vpop.xlane.xlu0 %563
          %v565 = vadd.f32 %v555, 0.0
          %v566 = vadd.f32 %v558, 0.0
          %v567 = vadd.f32 %v561, 0.0
          %v568 = vadd.f32 %v564, 0.0
          %v573 = vrot.slane %v566, 7
          %v574 = vsel %vm535, %v573, %v565
          %v575 = vrot.slane %v567, 6
          %v576 = vsel %vm538, %v575, %v574
          %v577 = vrot.slane %v568, 5
          %v578 = vsel %vm541, %v577, %v576
          %v579 = vperm.slane %v578, %v544
          %581 = vst.msk [vmem:[%s247 + $0x1] sm:$0x1] %vm547, %v579
          %v582 = vld [vmem:[#allocation4] sm:$0x1]
          %v583 = vld [vmem:[#allocation4 + $0x1] sm:$0x1]
          %v584 = vld [vmem:[#allocation4 + $0x2] sm:$0x1]
          %v585 = vld [vmem:[#allocation4 + $0x3] sm:$0x1]
          %v586 = vsel %vm513, %v582, 0.0
          %587 = vadd.xlane.f32.xlu0 %v586
          %v588 = vpop.xlane.xlu0 %587
          %v589 = vsel %vm513, %v583, 0.0
          %590 = vadd.xlane.f32.xlu0 %v589
          %v591 = vpop.xlane.xlu0 %590
          %v592 = vsel %vm513, %v584, 0.0
          %593 = vadd.xlane.f32.xlu0 %v592
          %v594 = vpop.xlane.xlu0 %593
          %v595 = vsel %vm513, %v585, 0.0
          %596 = vadd.xlane.f32.xlu0 %v595
          %v597 = vpop.xlane.xlu0 %596
          %v598 = vadd.f32 %v588, 0.0
          %v599 = vadd.f32 %v591, 0.0
          %v600 = vadd.f32 %v594, 0.0
          %v601 = vadd.f32 %v597, 0.0
          %v606 = vrot.slane %v599, 7
          %v607 = vsel %vm535, %v606, %v598
          %v608 = vrot.slane %v600, 6
          %v609 = vsel %vm538, %v608, %v607
          %v610 = vrot.slane %v601, 5
          %v611 = vsel %vm541, %v610, %v609
          %v612 = vperm.slane %v611, %v544
          %614 = vst.msk [vmem:[%s247 + $0x2] sm:$0x1] %vm547, %v612
          %v615 = vld [vmem:[#allocation5] sm:$0x1]
          %v616 = vld [vmem:[#allocation5 + $0x1] sm:$0x1]
          %v617 = vld [vmem:[#allocation5 + $0x2] sm:$0x1]
          %v618 = vld [vmem:[#allocation5 + $0x3] sm:$0x1]
          %v619 = vsel %vm513, %v615, 0.0
          %620 = vadd.xlane.f32.xlu0 %v619
          %v621 = vpop.xlane.xlu0 %620
          %v622 = vsel %vm513, %v616, 0.0
          %623 = vadd.xlane.f32.xlu0 %v622
          %v624 = vpop.xlane.xlu0 %623
          %v625 = vsel %vm513, %v617, 0.0
          %626 = vadd.xlane.f32.xlu0 %v625
          %v627 = vpop.xlane.xlu0 %626
          %v628 = vsel %vm513, %v618, 0.0
          %629 = vadd.xlane.f32.xlu0 %v628
          %v630 = vpop.xlane.xlu0 %629
          %v631 = vadd.f32 %v621, 0.0
          %v632 = vadd.f32 %v624, 0.0
          %v633 = vadd.f32 %v627, 0.0
          %v634 = vadd.f32 %v630, 0.0
          %v639 = vrot.slane %v632, 7
          %v640 = vsel %vm535, %v639, %v631
          %v641 = vrot.slane %v633, 6
          %v642 = vsel %vm538, %v641, %v640
          %v643 = vrot.slane %v634, 5
          %v644 = vsel %vm541, %v643, %v642
          %v645 = vperm.slane %v644, %v544
          %647 = vst.msk [vmem:[%s247 + $0x3] sm:$0x1] %vm547, %v645
        $region44: #{tpu_custom_call.1} parent=27 // pred_fallthru
          _
        %s648 = sand.u32 %s119, 1
        %s649 = scalar_lea.sflag [#allocation8], %s648
        %s650 = sand.u32 %s119, 1
        %s651 = smul.addr %s650, 4
        %s652 = scalar_lea.vmem [#allocation11], %s651
        // Predicated region
        $region45: #{tpu_custom_call.1} parent=27 // pred_check
          %p653 = pneg %p129
        $region46: #{tpu_custom_call.1} parent=27 // pred_check_branch
          %655 = sbr.rel (%p653) target = $region48
        $region47: #{tpu_custom_call.1} parent=27 // pred_region
          %657 = vsyncadd %s649, 0
          %s658 = sadd.s32 %s28, %s27
          %s659 = smul.addr %s658, 4
          %s660 = scalar_lea.hbm %s2, %s659
          %s662 = sshll.u32 %s652, 4
          %s663 = int_to_ptr.vmem [resolvable:$true] %s662
          %s664 = sshll.u32 %s660, 4
          %s665 = int_to_ptr.hbm [resolvable:$true] %s664
          %667 = dma.vmem_to_hbm [thread:$0]  %s663, 64, %s665, %s649
        $region48: #{tpu_custom_call.1} parent=27 // pred_fallthru
          _
      $region28: #{tpu_custom_call.1} parent=5 // pred_fallthru
        _
      %p668 = scmp.le.s32.totalorder 2, %s17
      // Predicated region
      $region49: #{tpu_custom_call.1} parent=5 // pred_check
        %p669 = pneg %p668
      $region50: #{tpu_custom_call.1} parent=5 // pred_check_branch
        %671 = sbr.rel (%p669) target = $region52
      $region51: #{tpu_custom_call.1} parent=5 // pred_region
        %s672 = ssub.s32 %s17, 2
        // Predicated region
        $region53: #{tpu_custom_call.1} parent=51 // pred_check
          %p673 = pneg %p135
        $region54: #{tpu_custom_call.1} parent=51 // pred_check_branch
          %675 = sbr.rel (%p673) target = $region56
        $region55: #{tpu_custom_call.1} parent=51 // pred_region
          %s676 = sand.u32 %s120, 1
          %s677 = scalar_lea.sflag [#allocation8], %s676
          %s678 = sand.u32 %s120, 1
          %s679 = smul.addr %s678, 4
          %s680 = scalar_lea.vmem [#allocation11], %s679
          %682 = dma.done %s677, 64
        $region56: #{tpu_custom_call.1} parent=51 // pred_fallthru
          _
      $region52: #{tpu_custom_call.1} parent=5 // pred_fallthru
        _
    $region6: #{tpu_custom_call.1} parent=1 // loop_footer
      %s21 = sadd.s32 1, %s17
    $region7: #{tpu_custom_call.1} parent=1 // loop_footer_branch
      %16 = sbr.rel target = $region3
    $region8: #{tpu_custom_call.1} parent=1 // loop_exit
      _
    %683 = vsyncpa [#allocation7], 1
    %s684 = scalar_lea.sflag [#allocation7], 1
    %685 = vsyncpa %s684, 1
    %686 = vsyncpa [#allocation10], 1
    %s687 = scalar_lea.sflag [#allocation10], 1
    %688 = vsyncpa %s687, 1
    %689 = vsyncpa [#allocation8], 1
    %s690 = scalar_lea.sflag [#allocation8], 1
    %691 = vsyncpa %s690, 1

</llo_original>
